<compile_context>
chip_gen: v6e
topology: v6e:2x2x1
jax: 0.10.0
libtpu: 0.0.40
codegen_flags: <defaults>
</compile_context>

<pallas_src>
import functools

import jax
import jax.numpy as jnp
from jax.experimental import pallas as pl
from jax.experimental.pallas import tpu as pltpu

# ---- model hyper-params (mirrors NeuralNetworkModel defaults at small sizes) ----
INPUT_SIZE = 32          # input_size
OUTPUT_SIZE = 8          # output_size (number of classes)
DENSE = 64               # dense_layer_size
NUM_HIDDEN = 6           # number_of_hidden_layers

# ---- lane-padded sizes used inside the kernel ----
DENSE_PAD = 128          # 64 -> 128 (full lane width for hidden activations/weights)
OUT_PAD = 128            # logits padded to 128 lanes (padded classes get bias -1e30)

MAX_TB = 256             # batch tile: fills the 256-row MXU on v6e/v7x
BATCH = 256              # example batch -> single grid step (latency-bound microkernel)


def _round_up(n: int, m: int) -> int:
    return ((n + m - 1) // m) * m


def _select_epilogue_dtype():
    """bf16 bias-add/ReLU epilogue on v6e/v7x (bf16 VPU); f32 on v5e and as the safe
    default (v5e VPU has no bf16 path)."""
    try:
        kind = jax.devices()[0].device_kind.lower()
    except Exception:
        return jnp.float32
    if "v6" in kind or "v7" in kind:
        return jnp.bfloat16
    return jnp.float32


_EPILOGUE_DTYPE = _select_epilogue_dtype()


def mlp_softmax_kernel(x_ref, w_in_ref, b_in_ref, w_h_ref, b_h_ref,
                       w_out_ref, b_out_ref, o_ref, *, ep_dtype):
    # input layer: bf16 operands -> MXU, f32 accumulation
    x = x_ref[...].astype(jnp.bfloat16)
    acc = jnp.dot(x, w_in_ref[...], preferred_element_type=jnp.float32)
    h = jnp.maximum(acc.astype(ep_dtype) + b_in_ref[...].astype(ep_dtype), 0.0)
    h = h.astype(jnp.bfloat16)

    # hidden layers (static unroll: NUM_HIDDEN Linear + ReLU blocks)
    for i in range(NUM_HIDDEN):
        acc = jnp.dot(h, w_h_ref[i], preferred_element_type=jnp.float32)
        h = jnp.maximum(acc.astype(ep_dtype) + b_h_ref[i].astype(ep_dtype), 0.0)
        h = h.astype(jnp.bfloat16)

    # output layer (padded classes get logit ~ -1e30 via the padded bias; padded
    # weight columns are exactly zero so the matmul contributes nothing there)
    y = jnp.dot(h, w_out_ref[...], preferred_element_type=jnp.float32) + b_out_ref[...]

    # softmax over dim=1 (classes), numerically stable, EXACT normalization
    y = y - jnp.max(y, axis=-1, keepdims=True)
    e = jnp.exp(y)
    probs = e / jnp.sum(e, axis=-1, keepdims=True)

    # store only the real classes: lane-narrow (TB, 8) store, no padded writeback
    o_ref[...] = probs[:, :OUTPUT_SIZE].astype(o_ref.dtype)


@jax.jit
def mlp_forward(x, w_in, b_in, w_h, b_h, w_out, b_out):
    """x: (B, INPUT_SIZE) f32.  Padded/bf16 params from pad_and_cast_params."""
    B = x.shape[0]
    # Batch tile: fill the 256-row MXU for large batches; single tile for small ones
    # (grid=(1,) -> no exposed per-step pipeline overhead on this microkernel).
    tb = MAX_TB if B >= MAX_TB else max(8, _round_up(B, 8))
    bp = _round_up(B, tb)
    if bp != B:
        x = jnp.pad(x, ((0, bp - B), (0, 0)))
    grid = (bp // tb,)

    out = pl.pallas_call(
        functools.partial(mlp_softmax_kernel, ep_dtype=_EPILOGUE_DTYPE),
        out_shape=jax.ShapeDtypeStruct((bp, OUTPUT_SIZE), jnp.float32),
        grid_spec=pltpu.PrefetchScalarGridSpec(
            num_scalar_prefetch=0,
            grid=grid,
            in_specs=[
                # activations: tiled over batch
                pl.BlockSpec((tb, INPUT_SIZE), lambda b: (b, 0)),
                # parameters: constant index_maps -> one resident copy, no re-DMA
                pl.BlockSpec((INPUT_SIZE, DENSE_PAD), lambda b: (0, 0)),
                pl.BlockSpec((1, DENSE_PAD), lambda b: (0, 0)),
                pl.BlockSpec((NUM_HIDDEN, DENSE_PAD, DENSE_PAD), lambda b: (0, 0, 0)),
                pl.BlockSpec((NUM_HIDDEN, 1, DENSE_PAD), lambda b: (0, 0, 0)),
                pl.BlockSpec((DENSE_PAD, OUT_PAD), lambda b: (0, 0)),
                pl.BlockSpec((1, OUT_PAD), lambda b: (0, 0)),
            ],
            # direct (tb, 8) output: no padded classes in HBM, no wrapper slice op
            out_specs=pl.BlockSpec((tb, OUTPUT_SIZE), lambda b: (b, 0)),
        ),
        compiler_params=pltpu.CompilerParams(
            dimension_semantics=("parallel",)),
    )(x, w_in, b_in, w_h, b_h, w_out, b_out)
    return out if bp == B else out[:B]


def init_params(key):
    """Deterministic init (Kaiming-uniform-ish, like torch.nn.Linear default).
    Weights stored pre-transposed as (in, out) so y = x @ W + b."""
    ks = jax.random.split(key, 2 * (NUM_HIDDEN + 2))
    ki = iter(ks)

    def linear(kw, kb, fan_in, fan_out):
        bound = 1.0 / jnp.sqrt(fan_in)
        w = jax.random.uniform(kw, (fan_in, fan_out), jnp.float32, -bound, bound)
        b = jax.random.uniform(kb, (1, fan_out), jnp.float32, -bound, bound)
        return w, b

    w_in, b_in = linear(next(ki), next(ki), INPUT_SIZE, DENSE)
    w_hs, b_hs = [], []
    for _ in range(NUM_HIDDEN):
        w, b = linear(next(ki), next(ki), DENSE, DENSE)
        w_hs.append(w)
        b_hs.append(b)
    w_h = jnp.stack(w_hs, axis=0)                       # (NUM_HIDDEN, DENSE, DENSE)
    b_h = jnp.stack(b_hs, axis=0)                       # (NUM_HIDDEN, 1, DENSE)
    w_out, b_out = linear(next(ki), next(ki), DENSE, OUTPUT_SIZE)
    return w_in, b_in, w_h, b_h, w_out, b_out


def pad_and_cast_params(w_in, b_in, w_h, b_h, w_out, b_out):
    """One-time wrapper-side prep: zero-pad feature dims to 128 lanes, cast weights to
    bf16 (halves param DMA, full-rate MXU).  Padded output-class biases are -1e30 so
    the padded classes contribute exp(-huge)=0 to the softmax.  Biases stay f32."""
    bf = jnp.bfloat16
    w_in_p = jnp.zeros((INPUT_SIZE, DENSE_PAD), bf).at[:, :DENSE].set(w_in.astype(bf))
    b_in_p = jnp.zeros((1, DENSE_PAD), jnp.float32).at[:, :DENSE].set(b_in)
    w_h_p = (jnp.zeros((NUM_HIDDEN, DENSE_PAD, DENSE_PAD), bf)
             .at[:, :DENSE, :DENSE].set(w_h.astype(bf)))
    b_h_p = (jnp.zeros((NUM_HIDDEN, 1, DENSE_PAD), jnp.float32)
             .at[:, :, :DENSE].set(b_h))
    w_out_p = jnp.zeros((DENSE_PAD, OUT_PAD), bf).at[:DENSE, :OUTPUT_SIZE].set(
        w_out.astype(bf))
    b_out_p = jnp.full((1, OUT_PAD), -1e30, jnp.float32).at[:, :OUTPUT_SIZE].set(b_out)
    return w_in_p, b_in_p, w_h_p, b_h_p, w_out_p, b_out_p


def reference_forward(x, w_in, b_in, w_h, b_h, w_out, b_out, ep_dtype=None):
    """Pure-JAX reference with the same numerics as the kernel (bf16 matmul operands,
    f32 accumulation, bias/ReLU epilogue in ep_dtype)."""
    if ep_dtype is None:
        ep_dtype = _EPILOGUE_DTYPE
    bf = jnp.bfloat16

    def mm(a, w):
        return jnp.dot(a.astype(bf), w.astype(bf), preferred_element_type=jnp.float32)

    h = jnp.maximum(mm(x, w_in).astype(ep_dtype) + b_in.astype(ep_dtype), 0.0)
    for i in range(NUM_HIDDEN):
        h = jnp.maximum(mm(h, w_h[i]).astype(ep_dtype) + b_h[i].astype(ep_dtype), 0.0)
    y = mm(h, w_out).astype(jnp.float32) + b_out
    return jax.nn.softmax(y, axis=1)


if __name__ == "__main__":
    key = jax.random.PRNGKey(0)
    k_x, k_x2, k_p = jax.random.split(key, 3)

    raw_params = init_params(k_p)
    kernel_params = pad_and_cast_params(*raw_params)

    # Main case: batch = 256 -> one 256-row tile, grid=(1,).
    x = jax.random.normal(k_x, (BATCH, INPUT_SIZE), jnp.float32)
    out = jax.block_until_ready(mlp_forward(x, *kernel_params))
    ref = reference_forward(x, *raw_params)
    assert out.shape == (BATCH, OUTPUT_SIZE)
    assert jnp.allclose(jnp.sum(out, axis=1), 1.0, atol=1e-3)
    assert jnp.allclose(out, ref, atol=2e-3, rtol=2e-3)

    # Remainder case: batch not a multiple of 8/TB (exercises the wrapper padding).
    B2 = 37
    x2 = jax.random.normal(k_x2, (B2, INPUT_SIZE), jnp.float32)
    out2 = jax.block_until_ready(mlp_forward(x2, *kernel_params))
    ref2 = reference_forward(x2, *raw_params)
    assert out2.shape == (B2, OUTPUT_SIZE)
    assert jnp.allclose(jnp.sum(out2, axis=1), 1.0, atol=1e-3)
    assert jnp.allclose(out2, ref2, atol=2e-3, rtol=2e-3)

    # TODO(synk): training-side pieces (CrossEntropyLoss/get_loss, SGD+momentum,
    # back_propagate_loss) are not part of the forward pass and are not implemented.
    print("KERNEL_OK")
</pallas_src>

<mosaic_0001>
module attributes {stable_mosaic.version = 11 : i64} {
  func.func @mlp_softmax_kernel(%arg0: i32, %arg1: memref<256x32xf32, #tpu.memory_space<vmem>>, %arg2: memref<32x128xbf16, #tpu.memory_space<vmem>>, %arg3: memref<1x128xf32, #tpu.memory_space<vmem>>, %arg4: memref<6x128x128xbf16, #tpu.memory_space<vmem>>, %arg5: memref<6x1x128xf32, #tpu.memory_space<vmem>>, %arg6: memref<128x128xbf16, #tpu.memory_space<vmem>>, %arg7: memref<1x128xf32, #tpu.memory_space<vmem>>, %arg8: memref<256x8xf32, #tpu.memory_space<vmem>>) attributes {dimension_semantics = [#tpu.dimension_semantics<parallel>], iteration_bounds = array<i64: 1>, scalar_prefetch = 0 : i64, scratch_operands = 0 : i64, tpu.core_type = #tpu.core_type<tc>, window_params = [{transform_indices = @transform_0, window_bounds = array<i64: 256, 32>}, {pipeline_mode = #tpu.pipeline_mode<synchronous>, transform_indices = @transform_1, window_bounds = array<i64: 32, 128>}, {pipeline_mode = #tpu.pipeline_mode<synchronous>, transform_indices = @transform_2, window_bounds = array<i64: 1, 128>}, {pipeline_mode = #tpu.pipeline_mode<synchronous>, transform_indices = @transform_3, window_bounds = array<i64: 6, 128, 128>}, {pipeline_mode = #tpu.pipeline_mode<synchronous>, transform_indices = @transform_4, window_bounds = array<i64: 6, 1, 128>}, {pipeline_mode = #tpu.pipeline_mode<synchronous>, transform_indices = @transform_5, window_bounds = array<i64: 128, 128>}, {pipeline_mode = #tpu.pipeline_mode<synchronous>, transform_indices = @transform_6, window_bounds = array<i64: 1, 128>}, {transform_indices = @transform_7, window_bounds = array<i64: 256, 8>}]} {
    %c0 = arith.constant 0 : index
    %c0_0 = arith.constant 0 : index
    %0 = vector.load %arg1[%c0, %c0_0] : memref<256x32xf32, #tpu.memory_space<vmem>>, vector<256x32xf32>
    %1 = arith.truncf %0 : vector<256x32xf32> to vector<256x32xbf16>
    %c0_1 = arith.constant 0 : index
    %c0_2 = arith.constant 0 : index
    %2 = vector.load %arg2[%c0_1, %c0_2] : memref<32x128xbf16, #tpu.memory_space<vmem>>, vector<32x128xbf16>
    %cst = arith.constant dense<0.000000e+00> : vector<256x128xf32>
    %3 = tpu.matmul %1, %2, %cst {dimension_numbers = #tpu.dot_dimension_numbers<[1], [0], [0], [1], [0, 0, 1, 1], [], []>} : vector<256x32xbf16>, vector<32x128xbf16>, vector<256x128xf32> -> vector<256x128xf32>
    %c0_3 = arith.constant 0 : index
    %c0_4 = arith.constant 0 : index
    %4 = vector.load %arg3[%c0_3, %c0_4] : memref<1x128xf32, #tpu.memory_space<vmem>>, vector<1x128xf32>
    %5 = vector.broadcast %4 : vector<1x128xf32> to vector<256x128xf32>
    %6 = arith.addf %3, %5 : vector<256x128xf32>
    %cst_5 = arith.constant 0.000000e+00 : f32
    %7 = vector.broadcast %cst_5 : f32 to vector<256x128xf32>
    %8 = arith.maximumf %6, %7 : vector<256x128xf32>
    %9 = arith.truncf %8 : vector<256x128xf32> to vector<256x128xbf16>
    %c0_6 = arith.constant 0 : index
    %c0_7 = arith.constant 0 : index
    %c0_8 = arith.constant 0 : index
    %10 = vector.load %arg4[%c0_6, %c0_7, %c0_8] : memref<6x128x128xbf16, #tpu.memory_space<vmem>>, vector<1x128x128xbf16>
    %11 = vector.shape_cast %10 : vector<1x128x128xbf16> to vector<128x128xbf16>
    %cst_9 = arith.constant dense<0.000000e+00> : vector<256x128xf32>
    %12 = tpu.matmul %9, %11, %cst_9 {dimension_numbers = #tpu.dot_dimension_numbers<[1], [0], [0], [1], [0, 0, 1, 1], [], []>} : vector<256x128xbf16>, vector<128x128xbf16>, vector<256x128xf32> -> vector<256x128xf32>
    %c0_10 = arith.constant 0 : index
    %c0_11 = arith.constant 0 : index
    %c0_12 = arith.constant 0 : index
    %13 = vector.load %arg5[%c0_10, %c0_11, %c0_12] : memref<6x1x128xf32, #tpu.memory_space<vmem>>, vector<1x1x128xf32>
    %14 = vector.shape_cast %13 : vector<1x1x128xf32> to vector<1x128xf32>
    %15 = vector.broadcast %14 : vector<1x128xf32> to vector<256x128xf32>
    %16 = arith.addf %12, %15 : vector<256x128xf32>
    %cst_13 = arith.constant 0.000000e+00 : f32
    %17 = vector.broadcast %cst_13 : f32 to vector<256x128xf32>
    %18 = arith.maximumf %16, %17 : vector<256x128xf32>
    %19 = arith.truncf %18 : vector<256x128xf32> to vector<256x128xbf16>
    %c1 = arith.constant 1 : index
    %c0_14 = arith.constant 0 : index
    %c0_15 = arith.constant 0 : index
    %20 = vector.load %arg4[%c1, %c0_14, %c0_15] : memref<6x128x128xbf16, #tpu.memory_space<vmem>>, vector<1x128x128xbf16>
    %21 = vector.shape_cast %20 : vector<1x128x128xbf16> to vector<128x128xbf16>
    %cst_16 = arith.constant dense<0.000000e+00> : vector<256x128xf32>
    %22 = tpu.matmul %19, %21, %cst_16 {dimension_numbers = #tpu.dot_dimension_numbers<[1], [0], [0], [1], [0, 0, 1, 1], [], []>} : vector<256x128xbf16>, vector<128x128xbf16>, vector<256x128xf32> -> vector<256x128xf32>
    %c1_17 = arith.constant 1 : index
    %c0_18 = arith.constant 0 : index
    %c0_19 = arith.constant 0 : index
    %23 = vector.load %arg5[%c1_17, %c0_18, %c0_19] : memref<6x1x128xf32, #tpu.memory_space<vmem>>, vector<1x1x128xf32>
    %24 = vector.shape_cast %23 : vector<1x1x128xf32> to vector<1x128xf32>
    %25 = vector.broadcast %24 : vector<1x128xf32> to vector<256x128xf32>
    %26 = arith.addf %22, %25 : vector<256x128xf32>
    %cst_20 = arith.constant 0.000000e+00 : f32
    %27 = vector.broadcast %cst_20 : f32 to vector<256x128xf32>
    %28 = arith.maximumf %26, %27 : vector<256x128xf32>
    %29 = arith.truncf %28 : vector<256x128xf32> to vector<256x128xbf16>
    %c2 = arith.constant 2 : index
    %c0_21 = arith.constant 0 : index
    %c0_22 = arith.constant 0 : index
    %30 = vector.load %arg4[%c2, %c0_21, %c0_22] : memref<6x128x128xbf16, #tpu.memory_space<vmem>>, vector<1x128x128xbf16>
    %31 = vector.shape_cast %30 : vector<1x128x128xbf16> to vector<128x128xbf16>
    %cst_23 = arith.constant dense<0.000000e+00> : vector<256x128xf32>
    %32 = tpu.matmul %29, %31, %cst_23 {dimension_numbers = #tpu.dot_dimension_numbers<[1], [0], [0], [1], [0, 0, 1, 1], [], []>} : vector<256x128xbf16>, vector<128x128xbf16>, vector<256x128xf32> -> vector<256x128xf32>
    %c2_24 = arith.constant 2 : index
    %c0_25 = arith.constant 0 : index
    %c0_26 = arith.constant 0 : index
    %33 = vector.load %arg5[%c2_24, %c0_25, %c0_26] : memref<6x1x128xf32, #tpu.memory_space<vmem>>, vector<1x1x128xf32>
    %34 = vector.shape_cast %33 : vector<1x1x128xf32> to vector<1x128xf32>
    %35 = vector.broadcast %34 : vector<1x128xf32> to vector<256x128xf32>
    %36 = arith.addf %32, %35 : vector<256x128xf32>
    %cst_27 = arith.constant 0.000000e+00 : f32
    %37 = vector.broadcast %cst_27 : f32 to vector<256x128xf32>
    %38 = arith.maximumf %36, %37 : vector<256x128xf32>
    %39 = arith.truncf %38 : vector<256x128xf32> to vector<256x128xbf16>
    %c3 = arith.constant 3 : index
    %c0_28 = arith.constant 0 : index
    %c0_29 = arith.constant 0 : index
    %40 = vector.load %arg4[%c3, %c0_28, %c0_29] : memref<6x128x128xbf16, #tpu.memory_space<vmem>>, vector<1x128x128xbf16>
    %41 = vector.shape_cast %40 : vector<1x128x128xbf16> to vector<128x128xbf16>
    %cst_30 = arith.constant dense<0.000000e+00> : vector<256x128xf32>
    %42 = tpu.matmul %39, %41, %cst_30 {dimension_numbers = #tpu.dot_dimension_numbers<[1], [0], [0], [1], [0, 0, 1, 1], [], []>} : vector<256x128xbf16>, vector<128x128xbf16>, vector<256x128xf32> -> vector<256x128xf32>
    %c3_31 = arith.constant 3 : index
    %c0_32 = arith.constant 0 : index
    %c0_33 = arith.constant 0 : index
    %43 = vector.load %arg5[%c3_31, %c0_32, %c0_33] : memref<6x1x128xf32, #tpu.memory_space<vmem>>, vector<1x1x128xf32>
    %44 = vector.shape_cast %43 : vector<1x1x128xf32> to vector<1x128xf32>
    %45 = vector.broadcast %44 : vector<1x128xf32> to vector<256x128xf32>
    %46 = arith.addf %42, %45 : vector<256x128xf32>
    %cst_34 = arith.constant 0.000000e+00 : f32
    %47 = vector.broadcast %cst_34 : f32 to vector<256x128xf32>
    %48 = arith.maximumf %46, %47 : vector<256x128xf32>
    %49 = arith.truncf %48 : vector<256x128xf32> to vector<256x128xbf16>
    %c4 = arith.constant 4 : index
    %c0_35 = arith.constant 0 : index
    %c0_36 = arith.constant 0 : index
    %50 = vector.load %arg4[%c4, %c0_35, %c0_36] : memref<6x128x128xbf16, #tpu.memory_space<vmem>>, vector<1x128x128xbf16>
    %51 = vector.shape_cast %50 : vector<1x128x128xbf16> to vector<128x128xbf16>
    %cst_37 = arith.constant dense<0.000000e+00> : vector<256x128xf32>
    %52 = tpu.matmul %49, %51, %cst_37 {dimension_numbers = #tpu.dot_dimension_numbers<[1], [0], [0], [1], [0, 0, 1, 1], [], []>} : vector<256x128xbf16>, vector<128x128xbf16>, vector<256x128xf32> -> vector<256x128xf32>
    %c4_38 = arith.constant 4 : index
    %c0_39 = arith.constant 0 : index
    %c0_40 = arith.constant 0 : index
    %53 = vector.load %arg5[%c4_38, %c0_39, %c0_40] : memref<6x1x128xf32, #tpu.memory_space<vmem>>, vector<1x1x128xf32>
    %54 = vector.shape_cast %53 : vector<1x1x128xf32> to vector<1x128xf32>
    %55 = vector.broadcast %54 : vector<1x128xf32> to vector<256x128xf32>
    %56 = arith.addf %52, %55 : vector<256x128xf32>
    %cst_41 = arith.constant 0.000000e+00 : f32
    %57 = vector.broadcast %cst_41 : f32 to vector<256x128xf32>
    %58 = arith.maximumf %56, %57 : vector<256x128xf32>
    %59 = arith.truncf %58 : vector<256x128xf32> to vector<256x128xbf16>
    %c5 = arith.constant 5 : index
    %c0_42 = arith.constant 0 : index
    %c0_43 = arith.constant 0 : index
    %60 = vector.load %arg4[%c5, %c0_42, %c0_43] : memref<6x128x128xbf16, #tpu.memory_space<vmem>>, vector<1x128x128xbf16>
    %61 = vector.shape_cast %60 : vector<1x128x128xbf16> to vector<128x128xbf16>
    %cst_44 = arith.constant dense<0.000000e+00> : vector<256x128xf32>
    %62 = tpu.matmul %59, %61, %cst_44 {dimension_numbers = #tpu.dot_dimension_numbers<[1], [0], [0], [1], [0, 0, 1, 1], [], []>} : vector<256x128xbf16>, vector<128x128xbf16>, vector<256x128xf32> -> vector<256x128xf32>
    %c5_45 = arith.constant 5 : index
    %c0_46 = arith.constant 0 : index
    %c0_47 = arith.constant 0 : index
    %63 = vector.load %arg5[%c5_45, %c0_46, %c0_47] : memref<6x1x128xf32, #tpu.memory_space<vmem>>, vector<1x1x128xf32>
    %64 = vector.shape_cast %63 : vector<1x1x128xf32> to vector<1x128xf32>
    %65 = vector.broadcast %64 : vector<1x128xf32> to vector<256x128xf32>
    %66 = arith.addf %62, %65 : vector<256x128xf32>
    %cst_48 = arith.constant 0.000000e+00 : f32
    %67 = vector.broadcast %cst_48 : f32 to vector<256x128xf32>
    %68 = arith.maximumf %66, %67 : vector<256x128xf32>
    %69 = arith.truncf %68 : vector<256x128xf32> to vector<256x128xbf16>
    %c0_49 = arith.constant 0 : index
    %c0_50 = arith.constant 0 : index
    %70 = vector.load %arg6[%c0_49, %c0_50] : memref<128x128xbf16, #tpu.memory_space<vmem>>, vector<128x128xbf16>
    %cst_51 = arith.constant dense<0.000000e+00> : vector<256x128xf32>
    %71 = tpu.matmul %69, %70, %cst_51 {dimension_numbers = #tpu.dot_dimension_numbers<[1], [0], [0], [1], [0, 0, 1, 1], [], []>} : vector<256x128xbf16>, vector<128x128xbf16>, vector<256x128xf32> -> vector<256x128xf32>
    %c0_52 = arith.constant 0 : index
    %c0_53 = arith.constant 0 : index
    %72 = vector.load %arg7[%c0_52, %c0_53] : memref<1x128xf32, #tpu.memory_space<vmem>>, vector<1x128xf32>
    %73 = vector.broadcast %72 : vector<1x128xf32> to vector<256x128xf32>
    %74 = arith.addf %71, %73 : vector<256x128xf32>
    %cst_54 = arith.constant dense<0xFF800000> : vector<256xf32>
    %75 = vector.multi_reduction <maximumf>, %74, %cst_54 [1] : vector<256x128xf32> to vector<256xf32>
    %76 = vector.shape_cast %75 : vector<256xf32> to vector<256x1xf32>
    %77 = vector.broadcast %76 : vector<256x1xf32> to vector<256x128xf32>
    %78 = arith.subf %74, %77 : vector<256x128xf32>
    %79 = math.exp %78 : vector<256x128xf32>
    %cst_55 = arith.constant dense<0.000000e+00> : vector<256xf32>
    %80 = vector.multi_reduction <add>, %79, %cst_55 [1] : vector<256x128xf32> to vector<256xf32>
    %81 = vector.shape_cast %80 : vector<256xf32> to vector<256x1xf32>
    %82 = vector.broadcast %81 : vector<256x1xf32> to vector<256x128xf32>
    %83 = arith.divf %79, %82 : vector<256x128xf32>
    %84 = vector.extract_strided_slice %83 {offsets = [0, 0], sizes = [256, 8], strides = [1, 1]} : vector<256x128xf32> to vector<256x8xf32>
    %c0_56 = arith.constant 0 : index
    %c0_57 = arith.constant 0 : index
    %85 = vector.load %arg8[%c0_56, %c0_57] : memref<256x8xf32, #tpu.memory_space<vmem>>, vector<256x8xf32>
    tpu.vector_store %arg8[%c0_56, %c0_57], %84 {strides = array<i32>} : memref<256x8xf32, #tpu.memory_space<vmem>>, vector<256x8xf32>,
    return
  }
  func.func @transform_0(%arg0: i32) -> (i32, i32) {
    %c0_i32 = arith.constant 0 : i32
    %c0_i32_0 = arith.constant 0 : i32
    return %arg0, %c0_i32 : i32, i32
  }
  func.func @transform_1(%arg0: i32) -> (i32, i32) {
    %c0_i32 = arith.constant 0 : i32
    %c0_i32_0 = arith.constant 0 : i32
    %c0_i32_1 = arith.constant 0 : i32
    return %c0_i32, %c0_i32_0 : i32, i32
  }
  func.func @transform_2(%arg0: i32) -> (i32, i32) {
    %c0_i32 = arith.constant 0 : i32
    %c0_i32_0 = arith.constant 0 : i32
    %c0_i32_1 = arith.constant 0 : i32
    return %c0_i32, %c0_i32_0 : i32, i32
  }
  func.func @transform_3(%arg0: i32) -> (i32, i32, i32) {
    %c0_i32 = arith.constant 0 : i32
    %c0_i32_0 = arith.constant 0 : i32
    %c0_i32_1 = arith.constant 0 : i32
    %c0_i32_2 = arith.constant 0 : i32
    return %c0_i32, %c0_i32_0, %c0_i32_1 : i32, i32, i32
  }
  func.func @transform_4(%arg0: i32) -> (i32, i32, i32) {
    %c0_i32 = arith.constant 0 : i32
    %c0_i32_0 = arith.constant 0 : i32
    %c0_i32_1 = arith.constant 0 : i32
    %c0_i32_2 = arith.constant 0 : i32
    return %c0_i32, %c0_i32_0, %c0_i32_1 : i32, i32, i32
  }
  func.func @transform_5(%arg0: i32) -> (i32, i32) {
    %c0_i32 = arith.constant 0 : i32
    %c0_i32_0 = arith.constant 0 : i32
    %c0_i32_1 = arith.constant 0 : i32
    return %c0_i32, %c0_i32_0 : i32, i32
  }
  func.func @transform_6(%arg0: i32) -> (i32, i32) {
    %c0_i32 = arith.constant 0 : i32
    %c0_i32_0 = arith.constant 0 : i32
    %c0_i32_1 = arith.constant 0 : i32
    return %c0_i32, %c0_i32_0 : i32, i32
  }
  func.func @transform_7(%arg0: i32) -> (i32, i32) {
    %c0_i32 = arith.constant 0 : i32
    %c0_i32_0 = arith.constant 0 : i32
    return %arg0, %c0_i32 : i32, i32
  }
}

</mosaic_0001>

<llo_original>
// kernel: mlp_forward.1
$region0: #{mlp_forward.1}
  #allocation0 [shape = 'u32[]', space=smem, size = 0x4, offset = 0x4, fixed_abs, tag = 'smem constant byte address 0x4 - core index']
  #allocation1 [shape = 'u32[144,128]{1,0:T(1,128)}', space=vmem, size = 0x12000, scoped, tag = 'internal scratch']
  %s0 = inlined_call_operand.vmem [shape: f32[256,32], index: 0, kind: input, shape index: {}]
  %s1 = inlined_call_operand.vmem [shape: bf16[32,128], index: 1, kind: input, shape index: {}]
  %s2 = inlined_call_operand.vmem [shape: f32[1,128], index: 2, kind: input, shape index: {}]
  %s3 = inlined_call_operand.hbm [shape: bf16[6,128,128], index: 3, kind: input, shape index: {}]
  %s4 = inlined_call_operand.vmem [shape: f32[6,1,128], index: 4, kind: input, shape index: {}]
  %s5 = inlined_call_operand.vmem [shape: bf16[128,128], index: 5, kind: input, shape index: {}]
  %s6 = inlined_call_operand.vmem [shape: f32[1,128], index: 6, kind: input, shape index: {}]
  %s7 = inlined_call_operand.vmem [shape: f32[256,8], index: 7, kind: output, shape index: {}]
  %s8 = sld [smem:[#allocation0]]
  $region42: #{mlp_forward.1} parent=0
    _
  %s10 = ssub.s32 1, %s8
  %s11 = scalar_select 0, %s10, %s8
  $region1: #{mlp_forward.1} parent=0
    #allocation2 [shape = 'u8[196608]{0}', space=vmem, size = 0x30000, scoped, tag = 'input window, operand 3, single buffered']
    #allocation3 [shape = 's32[1]{0}', space=sflag, size = 0x4, scoped, tag = 'scoped memory for mlp_forward.1']
    %12 = vsyncpa [#allocation3], 0
    // Predicated region
    $region2: #{mlp_forward.1} parent=1 // pred_check
      _
    $region3: #{mlp_forward.1} parent=1 // pred_check_branch
      %14 = sbr.rel (0) target = $region5
    $region4: #{mlp_forward.1} parent=1 // pred_region
      _
    $region5: #{mlp_forward.1} parent=1 // pred_fallthru
      _
    // Predicated region
    $region6: #{mlp_forward.1} parent=1 // pred_check
      _
    $region7: #{mlp_forward.1} parent=1 // pred_check_branch
      %16 = sbr.rel (0) target = $region9
    $region8: #{mlp_forward.1} parent=1 // pred_region
      _
    $region9: #{mlp_forward.1} parent=1 // pred_fallthru
      _
    // Predicated region
    $region10: #{mlp_forward.1} parent=1 // pred_check
      _
    $region11: #{mlp_forward.1} parent=1 // pred_check_branch
      %18 = sbr.rel (0) target = $region13
    $region12: #{mlp_forward.1} parent=1 // pred_region
      _
    $region13: #{mlp_forward.1} parent=1 // pred_fallthru
      _
    // Predicated region
    $region14: #{mlp_forward.1} parent=1 // pred_check
      _
    $region15: #{mlp_forward.1} parent=1 // pred_check_branch
      %20 = sbr.rel (0) target = $region17
    $region16: #{mlp_forward.1} parent=1 // pred_region
      %s22 = ssub.s32 6144, 6144
      %23 = vsyncadd [#allocation3], %s22
      %s24 = sshll.u32 [#allocation2], 4
      %s25 = int_to_ptr.vmem [resolvable:$true] %s24
      %30 = dma.hbm_to_vmem [thread:$0]  %s3, 6144, %s25, [#allocation3], 64, 64, 4
    $region17: #{mlp_forward.1} parent=1 // pred_fallthru
      _
    // Predicated region
    $region18: #{mlp_forward.1} parent=1 // pred_check
      _
    $region19: #{mlp_forward.1} parent=1 // pred_check_branch
      %32 = sbr.rel (0) target = $region21
    $region20: #{mlp_forward.1} parent=1 // pred_region
      _
    $region21: #{mlp_forward.1} parent=1 // pred_fallthru
      _
    // Predicated region
    $region22: #{mlp_forward.1} parent=1 // pred_check
      _
    $region23: #{mlp_forward.1} parent=1 // pred_check_branch
      %34 = sbr.rel (0) target = $region25
    $region24: #{mlp_forward.1} parent=1 // pred_region
      _
    $region25: #{mlp_forward.1} parent=1 // pred_fallthru
      _
    // Predicated region
    $region26: #{mlp_forward.1} parent=1 // pred_check
      _
    $region27: #{mlp_forward.1} parent=1 // pred_check_branch
      %36 = sbr.rel (0) target = $region29
    $region28: #{mlp_forward.1} parent=1 // pred_region
      _
    $region29: #{mlp_forward.1} parent=1 // pred_fallthru
      _
    // Predicated region
    $region30: #{mlp_forward.1} parent=1 // pred_check
      _
    $region31: #{mlp_forward.1} parent=1 // pred_check_branch
      %38 = sbr.rel (0) target = $region33
    $region32: #{mlp_forward.1} parent=1 // pred_region
      %39 = dma.done [#allocation3], 6144
    $region33: #{mlp_forward.1} parent=1 // pred_fallthru
      _
    %v41 = vld [vmem:[%s0] sm:$0xff]
    %v42 = vld [vmem:[%s0 + $0x8] sm:$0xff]
    %v43 = vld [vmem:[%s0 + $0x10] sm:$0xff]
    %v44 = vld [vmem:[%s0 + $0x18] sm:$0xff]
    %v45 = vld [vmem:[%s0 + $0x20] sm:$0xff]
    %v46 = vld [vmem:[%s0 + $0x28] sm:$0xff]
    %v47 = vld [vmem:[%s0 + $0x30] sm:$0xff]
    %v48 = vld [vmem:[%s0 + $0x38] sm:$0xff]
    %v49 = vld [vmem:[%s0 + $0x40] sm:$0xff]
    %v50 = vld [vmem:[%s0 + $0x48] sm:$0xff]
    %v51 = vld [vmem:[%s0 + $0x50] sm:$0xff]
    %v52 = vld [vmem:[%s0 + $0x58] sm:$0xff]
    %v53 = vld [vmem:[%s0 + $0x60] sm:$0xff]
    %v54 = vld [vmem:[%s0 + $0x68] sm:$0xff]
    %v55 = vld [vmem:[%s0 + $0x70] sm:$0xff]
    %v56 = vld [vmem:[%s0 + $0x78] sm:$0xff]
    %v57 = vld [vmem:[%s0 + $0x80] sm:$0xff]
    %v58 = vld [vmem:[%s0 + $0x88] sm:$0xff]
    %v59 = vld [vmem:[%s0 + $0x90] sm:$0xff]
    %v60 = vld [vmem:[%s0 + $0x98] sm:$0xff]
    %v61 = vld [vmem:[%s0 + $0xa0] sm:$0xff]
    %v62 = vld [vmem:[%s0 + $0xa8] sm:$0xff]
    %v63 = vld [vmem:[%s0 + $0xb0] sm:$0xff]
    %v64 = vld [vmem:[%s0 + $0xb8] sm:$0xff]
    %v65 = vld [vmem:[%s0 + $0xc0] sm:$0xff]
    %v66 = vld [vmem:[%s0 + $0xc8] sm:$0xff]
    %v67 = vld [vmem:[%s0 + $0xd0] sm:$0xff]
    %v68 = vld [vmem:[%s0 + $0xd8] sm:$0xff]
    %v69 = vld [vmem:[%s0 + $0xe0] sm:$0xff]
    %v70 = vld [vmem:[%s0 + $0xe8] sm:$0xff]
    %v71 = vld [vmem:[%s0 + $0xf0] sm:$0xff]
    %v72 = vld [vmem:[%s0 + $0xf8] sm:$0xff]
    %v73 = vpack.c.bf16 %v42, %v41
    %v74 = vpack.c.bf16 %v44, %v43
    %v75 = vpack.c.bf16 %v46, %v45
    %v76 = vpack.c.bf16 %v48, %v47
    %v77 = vpack.c.bf16 %v50, %v49
    %v78 = vpack.c.bf16 %v52, %v51
    %v79 = vpack.c.bf16 %v54, %v53
    %v80 = vpack.c.bf16 %v56, %v55
    %v81 = vpack.c.bf16 %v58, %v57
    %v82 = vpack.c.bf16 %v60, %v59
    %v83 = vpack.c.bf16 %v62, %v61
    %v84 = vpack.c.bf16 %v64, %v63
    %v85 = vpack.c.bf16 %v66, %v65
    %v86 = vpack.c.bf16 %v68, %v67
    %v87 = vpack.c.bf16 %v70, %v69
    %v88 = vpack.c.bf16 %v72, %v71
    %v89 = vld [vmem:[%s1] sm:$0xf]
    %v90 = vld [vmem:[%s1 + $0x4] sm:$0xf]
    %v91 = vld [vmem:[%s1 + $0x8] sm:$0xf]
    %v92 = vld [vmem:[%s1 + $0xc] sm:$0xf]
    %v93 = vld [vmem:[%s2] sm:$0x1]
    %v95 = vlaneseq
    %v96 = vshrl.u32 %v95, 7
    %v97 = vsub.s32 0, %v96
    %v98 = vrot.slane %v93, %v97
    %v104 = vunpack.c.l.b16 %v89
    %v105 = vunpack.c.l.b16 %v90
    %v106 = vunpack.c.l.b16 %v91
    %v107 = vunpack.c.l.b16 %v92
    %v108 = vpack.c.b16 %v105, %v104
    %v109 = vpack.c.b16 %v107, %v106
    %vm112 = vcmask 261120
    %v114 = vsel %vm112, %v73, 0
    %v117 = vsel %vm112, %v74, 0
    %v120 = vsel %vm112, %v75, 0
    %v123 = vsel %vm112, %v76, 0
    %v126 = vsel %vm112, %v77, 0
    %v129 = vsel %vm112, %v78, 0
    %v132 = vsel %vm112, %v79, 0
    %v135 = vsel %vm112, %v80, 0
    %v138 = vsel %vm112, %v81, 0
    %v141 = vsel %vm112, %v82, 0
    %v144 = vsel %vm112, %v83, 0
    %v147 = vsel %vm112, %v84, 0
    %v150 = vsel %vm112, %v85, 0
    %v153 = vsel %vm112, %v86, 0
    %v156 = vsel %vm112, %v87, 0
    %v159 = vsel %vm112, %v88, 0
    %161 = vmatprep.subr.bf16.mxu0 0
    %162 = vmatpush1.bf16.msra.mxu0 0
    %163 = vmatprep.subr.bf16.mxu0 0
    %164 = vmatpush1.bf16.msra.mxu0 0
    %165 = vmatprep.subr.bf16.mxu0 0
    %166 = vmatpush1.bf16.msra.mxu0 0
    %167 = vmatprep.subr.bf16.mxu0 0
    %168 = vmatpush1.bf16.msra.mxu0 0
    %169 = vmatprep.subr.bf16.mxu0 0
    %170 = vmatpush1.bf16.msra.mxu0 0
    %171 = vmatprep.subr.bf16.mxu0 0
    %172 = vmatpush1.bf16.msra.mxu0 0
    %173 = vmatprep.subr.bf16.mxu0 0
    %174 = vmatpush1.bf16.msra.mxu0 %v109
    %175 = vmatprep.subr.bf16.mxu0 0
    %176 = vmatpush1.bf16.msra.mxu0 %v108
    %177 = vmatprep.subr.bf16.mxu0 0
    %178 = vmatpush2.bf16.msra.mxu0 0
    %179 = vmatprep.subr.bf16.mxu0 0
    %180 = vmatpush2.bf16.msra.mxu0 0
    %181 = vmatprep.subr.bf16.mxu0 0
    %182 = vmatpush2.bf16.msra.mxu0 0
    %183 = vmatprep.subr.bf16.mxu0 0
    %184 = vmatpush2.bf16.msra.mxu0 0
    %185 = vmatprep.subr.bf16.mxu0 0
    %186 = vmatpush2.bf16.msra.mxu0 0
    %187 = vmatprep.subr.bf16.mxu0 0
    %188 = vmatpush2.bf16.msra.mxu0 0
    %189 = vmatprep.subr.bf16.mxu0 0
    %190 = vmatpush2.bf16.msra.mxu0 0
    %191 = vmatprep.subr.bf16.mxu0 0
    %192 = vmatpush2.bf16.msra.mxu0 0
    %193 = vmatprep.mubr.bf16.mxu0 0
    %194 = vmatmul.mubr.bf16.gmra.mxu0 %v114
    %v195 = vpop.f32.mrf.mxu0
    %v196 = vadd.f32 %v98, %v195
    %v197 = vpop.f32.mrf.mxu0
    %v198 = vpop.f32.mrf.mxu0
    %v199 = vadd.f32 %v98, %v198
    %v200 = vpop.f32.mrf.mxu0
    %201 = vmatprep.mubr.bf16.mxu0 0
    %202 = vmatmul.mubr.bf16.gmra.mxu0 %v117
    %v203 = vpop.f32.mrf.mxu0
    %v204 = vadd.f32 %v98, %v203
    %v205 = vpop.f32.mrf.mxu0
    %v206 = vpop.f32.mrf.mxu0
    %v207 = vadd.f32 %v98, %v206
    %v208 = vpop.f32.mrf.mxu0
    %209 = vmatprep.mubr.bf16.mxu0 0
    %210 = vmatmul.mubr.bf16.gmra.mxu0 %v120
    %v211 = vpop.f32.mrf.mxu0
    %v212 = vadd.f32 %v98, %v211
    %v213 = vpop.f32.mrf.mxu0
    %v214 = vpop.f32.mrf.mxu0
    %v215 = vadd.f32 %v98, %v214
    %v216 = vpop.f32.mrf.mxu0
    %217 = vmatprep.mubr.bf16.mxu0 0
    %218 = vmatmul.mubr.bf16.gmra.mxu0 %v123
    %v219 = vpop.f32.mrf.mxu0
    %v220 = vadd.f32 %v98, %v219
    %v221 = vpop.f32.mrf.mxu0
    %v222 = vpop.f32.mrf.mxu0
    %v223 = vadd.f32 %v98, %v222
    %v224 = vpop.f32.mrf.mxu0
    %225 = vmatprep.mubr.bf16.mxu0 0
    %226 = vmatmul.mubr.bf16.gmra.mxu0 %v126
    %v227 = vpop.f32.mrf.mxu0
    %v228 = vadd.f32 %v98, %v227
    %v229 = vpop.f32.mrf.mxu0
    %v230 = vpop.f32.mrf.mxu0
    %v231 = vadd.f32 %v98, %v230
    %v232 = vpop.f32.mrf.mxu0
    %233 = vmatprep.mubr.bf16.mxu0 0
    %234 = vmatmul.mubr.bf16.gmra.mxu0 %v129
    %v235 = vpop.f32.mrf.mxu0
    %v236 = vadd.f32 %v98, %v235
    %v237 = vpop.f32.mrf.mxu0
    %v238 = vpop.f32.mrf.mxu0
    %v239 = vadd.f32 %v98, %v238
    %v240 = vpop.f32.mrf.mxu0
    %241 = vmatprep.mubr.bf16.mxu0 0
    %242 = vmatmul.mubr.bf16.gmra.mxu0 %v132
    %v243 = vpop.f32.mrf.mxu0
    %v244 = vadd.f32 %v98, %v243
    %v245 = vpop.f32.mrf.mxu0
    %v246 = vpop.f32.mrf.mxu0
    %v247 = vadd.f32 %v98, %v246
    %v248 = vpop.f32.mrf.mxu0
    %249 = vmatprep.mubr.bf16.mxu0 0
    %250 = vmatmul.mubr.bf16.gmra.mxu0 %v135
    %v251 = vpop.f32.mrf.mxu0
    %v252 = vadd.f32 %v98, %v251
    %v253 = vpop.f32.mrf.mxu0
    %v254 = vpop.f32.mrf.mxu0
    %v255 = vadd.f32 %v98, %v254
    %v256 = vpop.f32.mrf.mxu0
    %257 = vmatprep.mubr.bf16.mxu0 0
    %258 = vmatmul.mubr.bf16.gmra.mxu0 %v138
    %v259 = vpop.f32.mrf.mxu0
    %v260 = vadd.f32 %v98, %v259
    %v261 = vpop.f32.mrf.mxu0
    %v262 = vpop.f32.mrf.mxu0
    %v263 = vadd.f32 %v98, %v262
    %v264 = vpop.f32.mrf.mxu0
    %265 = vmatprep.mubr.bf16.mxu0 0
    %266 = vmatmul.mubr.bf16.gmra.mxu0 %v141
    %v267 = vpop.f32.mrf.mxu0
    %v268 = vadd.f32 %v98, %v267
    %v269 = vpop.f32.mrf.mxu0
    %v270 = vpop.f32.mrf.mxu0
    %v271 = vadd.f32 %v98, %v270
    %v272 = vpop.f32.mrf.mxu0
    %273 = vmatprep.mubr.bf16.mxu0 0
    %274 = vmatmul.mubr.bf16.gmra.mxu0 %v144
    %v275 = vpop.f32.mrf.mxu0
    %v276 = vadd.f32 %v98, %v275
    %v277 = vpop.f32.mrf.mxu0
    %v278 = vpop.f32.mrf.mxu0
    %v279 = vadd.f32 %v98, %v278
    %v280 = vpop.f32.mrf.mxu0
    %281 = vmatprep.mubr.bf16.mxu0 0
    %282 = vmatmul.mubr.bf16.gmra.mxu0 %v147
    %v283 = vpop.f32.mrf.mxu0
    %v284 = vadd.f32 %v98, %v283
    %v285 = vpop.f32.mrf.mxu0
    %v286 = vpop.f32.mrf.mxu0
    %v287 = vadd.f32 %v98, %v286
    %v288 = vpop.f32.mrf.mxu0
    %289 = vmatprep.mubr.bf16.mxu0 0
    %290 = vmatmul.mubr.bf16.gmra.mxu0 %v150
    %v291 = vpop.f32.mrf.mxu0
    %v292 = vadd.f32 %v98, %v291
    %v293 = vpop.f32.mrf.mxu0
    %v294 = vpop.f32.mrf.mxu0
    %v295 = vadd.f32 %v98, %v294
    %v296 = vpop.f32.mrf.mxu0
    %297 = vmatprep.mubr.bf16.mxu0 0
    %298 = vmatmul.mubr.bf16.gmra.mxu0 %v153
    %v299 = vpop.f32.mrf.mxu0
    %v300 = vadd.f32 %v98, %v299
    %v301 = vpop.f32.mrf.mxu0
    %v302 = vpop.f32.mrf.mxu0
    %v303 = vadd.f32 %v98, %v302
    %v304 = vpop.f32.mrf.mxu0
    %305 = vmatprep.mubr.bf16.mxu0 0
    %306 = vmatmul.mubr.bf16.gmra.mxu0 %v156
    %v307 = vpop.f32.mrf.mxu0
    %v308 = vadd.f32 %v98, %v307
    %v309 = vpop.f32.mrf.mxu0
    %v310 = vpop.f32.mrf.mxu0
    %v311 = vadd.f32 %v98, %v310
    %v312 = vpop.f32.mrf.mxu0
    %313 = vmatprep.mubr.bf16.mxu0 0
    %314 = vmatmul.mubr.bf16.gmra.mxu0 %v159
    %v315 = vpop.f32.mrf.mxu0
    %v316 = vadd.f32 %v98, %v315
    %v317 = vpop.f32.mrf.mxu0
    %v318 = vpop.f32.mrf.mxu0
    %v319 = vadd.f32 %v98, %v318
    %v320 = vpop.f32.mrf.mxu0
    %321 = vdwg.mxu0
    %v322 = vmax.f32 %v196, 0.0
    %v323 = vmax.f32 %v199, 0.0
    %v324 = vmax.f32 %v204, 0.0
    %v325 = vmax.f32 %v207, 0.0
    %v326 = vmax.f32 %v212, 0.0
    %v327 = vmax.f32 %v215, 0.0
    %v328 = vmax.f32 %v220, 0.0
    %v329 = vmax.f32 %v223, 0.0
    %v330 = vmax.f32 %v228, 0.0
    %v331 = vmax.f32 %v231, 0.0
    %v332 = vmax.f32 %v236, 0.0
    %v333 = vmax.f32 %v239, 0.0
    %v334 = vmax.f32 %v244, 0.0
    %v335 = vmax.f32 %v247, 0.0
    %v336 = vmax.f32 %v252, 0.0
    %v337 = vmax.f32 %v255, 0.0
    %v338 = vmax.f32 %v260, 0.0
    %v339 = vmax.f32 %v263, 0.0
    %v340 = vmax.f32 %v268, 0.0
    %v341 = vmax.f32 %v271, 0.0
    %v342 = vmax.f32 %v276, 0.0
    %v343 = vmax.f32 %v279, 0.0
    %v344 = vmax.f32 %v284, 0.0
    %v345 = vmax.f32 %v287, 0.0
    %v346 = vmax.f32 %v292, 0.0
    %v347 = vmax.f32 %v295, 0.0
    %v348 = vmax.f32 %v300, 0.0
    %v349 = vmax.f32 %v303, 0.0
    %v350 = vmax.f32 %v308, 0.0
    %v351 = vmax.f32 %v311, 0.0
    %v352 = vmax.f32 %v316, 0.0
    %v353 = vmax.f32 %v319, 0.0
    %v354 = vpack.c.bf16 %v323, %v322
    %v355 = vpack.c.bf16 %v325, %v324
    %v356 = vpack.c.bf16 %v327, %v326
    %v357 = vpack.c.bf16 %v329, %v328
    %v358 = vpack.c.bf16 %v331, %v330
    %v359 = vpack.c.bf16 %v333, %v332
    %v360 = vpack.c.bf16 %v335, %v334
    %v361 = vpack.c.bf16 %v337, %v336
    %v362 = vpack.c.bf16 %v339, %v338
    %v363 = vpack.c.bf16 %v341, %v340
    %v364 = vpack.c.bf16 %v343, %v342
    %v365 = vpack.c.bf16 %v345, %v344
    %v366 = vpack.c.bf16 %v347, %v346
    %v367 = vpack.c.bf16 %v349, %v348
    %v368 = vpack.c.bf16 %v351, %v350
    %v369 = vpack.c.bf16 %v353, %v352
    %v370 = vld [vmem:[#allocation2] sm:$0xf]
    %v371 = vld [vmem:[#allocation2 + $0x4] sm:$0xf]
    %v372 = vld [vmem:[#allocation2 + $0x8] sm:$0xf]
    %v373 = vld [vmem:[#allocation2 + $0xc] sm:$0xf]
    %v374 = vld [vmem:[#allocation2 + $0x10] sm:$0xf]
    %v375 = vld [vmem:[#allocation2 + $0x14] sm:$0xf]
    %v376 = vld [vmem:[#allocation2 + $0x18] sm:$0xf]
    %v377 = vld [vmem:[#allocation2 + $0x1c] sm:$0xf]
    %v378 = vld [vmem:[#allocation2 + $0x20] sm:$0xf]
    %v379 = vld [vmem:[#allocation2 + $0x24] sm:$0xf]
    %v380 = vld [vmem:[#allocation2 + $0x28] sm:$0xf]
    %v381 = vld [vmem:[#allocation2 + $0x2c] sm:$0xf]
    %v382 = vld [vmem:[#allocation2 + $0x30] sm:$0xf]
    %v383 = vld [vmem:[#allocation2 + $0x34] sm:$0xf]
    %v384 = vld [vmem:[#allocation2 + $0x38] sm:$0xf]
    %v385 = vld [vmem:[#allocation2 + $0x3c] sm:$0xf]
    %v386 = vld [vmem:[%s4] sm:$0x1]
    %v388 = vlaneseq
    %v389 = vshrl.u32 %v388, 7
    %v390 = vsub.s32 0, %v389
    %v391 = vrot.slane %v386, %v390
    %v409 = vunpack.c.l.b16 %v370
    %v410 = vunpack.c.l.b16 %v371
    %v411 = vunpack.c.l.b16 %v372
    %v412 = vunpack.c.l.b16 %v373
    %v413 = vunpack.c.l.b16 %v374
    %v414 = vunpack.c.l.b16 %v375
    %v415 = vunpack.c.l.b16 %v376
    %v416 = vunpack.c.l.b16 %v377
    %v417 = vunpack.c.l.b16 %v378
    %v418 = vunpack.c.l.b16 %v379
    %v419 = vunpack.c.l.b16 %v380
    %v420 = vunpack.c.l.b16 %v381
    %v421 = vunpack.c.l.b16 %v382
    %v422 = vunpack.c.l.b16 %v383
    %v423 = vunpack.c.l.b16 %v384
    %v424 = vunpack.c.l.b16 %v385
    %v425 = vpack.c.b16 %v410, %v409
    %v426 = vpack.c.b16 %v412, %v411
    %v427 = vpack.c.b16 %v414, %v413
    %v428 = vpack.c.b16 %v416, %v415
    %v429 = vpack.c.b16 %v418, %v417
    %v430 = vpack.c.b16 %v420, %v419
    %v431 = vpack.c.b16 %v422, %v421
    %v432 = vpack.c.b16 %v424, %v423
    %441 = vmatprep.subr.bf16.mxu0 0
    %442 = vmatpush1.bf16.msra.mxu0 %v432
    %443 = vmatprep.subr.bf16.mxu0 0
    %444 = vmatpush1.bf16.msra.mxu0 %v431
    %445 = vmatprep.subr.bf16.mxu0 0
    %446 = vmatpush1.bf16.msra.mxu0 %v430
    %447 = vmatprep.subr.bf16.mxu0 0
    %448 = vmatpush1.bf16.msra.mxu0 %v429
    %449 = vmatprep.subr.bf16.mxu0 0
    %450 = vmatpush1.bf16.msra.mxu0 %v428
    %451 = vmatprep.subr.bf16.mxu0 0
    %452 = vmatpush1.bf16.msra.mxu0 %v427
    %453 = vmatprep.subr.bf16.mxu0 0
    %454 = vmatpush1.bf16.msra.mxu0 %v426
    %455 = vmatprep.subr.bf16.mxu0 0
    %456 = vmatpush1.bf16.msra.mxu0 %v425
    %457 = vmatprep.subr.bf16.mxu0 0
    %458 = vmatpush2.bf16.msra.mxu0 0
    %459 = vmatprep.subr.bf16.mxu0 0
    %460 = vmatpush2.bf16.msra.mxu0 0
    %461 = vmatprep.subr.bf16.mxu0 0
    %462 = vmatpush2.bf16.msra.mxu0 0
    %463 = vmatprep.subr.bf16.mxu0 0
    %464 = vmatpush2.bf16.msra.mxu0 0
    %465 = vmatprep.subr.bf16.mxu0 0
    %466 = vmatpush2.bf16.msra.mxu0 0
    %467 = vmatprep.subr.bf16.mxu0 0
    %468 = vmatpush2.bf16.msra.mxu0 0
    %469 = vmatprep.subr.bf16.mxu0 0
    %470 = vmatpush2.bf16.msra.mxu0 0
    %471 = vmatprep.subr.bf16.mxu0 0
    %472 = vmatpush2.bf16.msra.mxu0 0
    %473 = vmatprep.mubr.bf16.mxu0 0
    %474 = vmatmul.mubr.bf16.gmra.mxu0 %v354
    %v475 = vpop.f32.mrf.mxu0
    %v476 = vadd.f32 %v391, %v475
    %v477 = vpop.f32.mrf.mxu0
    %v478 = vpop.f32.mrf.mxu0
    %v479 = vadd.f32 %v391, %v478
    %v480 = vpop.f32.mrf.mxu0
    %481 = vmatprep.mubr.bf16.mxu0 0
    %482 = vmatmul.mubr.bf16.gmra.mxu0 %v355
    %v483 = vpop.f32.mrf.mxu0
    %v484 = vadd.f32 %v391, %v483
    %v485 = vpop.f32.mrf.mxu0
    %v486 = vpop.f32.mrf.mxu0
    %v487 = vadd.f32 %v391, %v486
    %v488 = vpop.f32.mrf.mxu0
    %489 = vmatprep.mubr.bf16.mxu0 0
    %490 = vmatmul.mubr.bf16.gmra.mxu0 %v356
    %v491 = vpop.f32.mrf.mxu0
    %v492 = vadd.f32 %v391, %v491
    %v493 = vpop.f32.mrf.mxu0
    %v494 = vpop.f32.mrf.mxu0
    %v495 = vadd.f32 %v391, %v494
    %v496 = vpop.f32.mrf.mxu0
    %497 = vmatprep.mubr.bf16.mxu0 0
    %498 = vmatmul.mubr.bf16.gmra.mxu0 %v357
    %v499 = vpop.f32.mrf.mxu0
    %v500 = vadd.f32 %v391, %v499
    %v501 = vpop.f32.mrf.mxu0
    %v502 = vpop.f32.mrf.mxu0
    %v503 = vadd.f32 %v391, %v502
    %v504 = vpop.f32.mrf.mxu0
    %505 = vmatprep.mubr.bf16.mxu0 0
    %506 = vmatmul.mubr.bf16.gmra.mxu0 %v358
    %v507 = vpop.f32.mrf.mxu0
    %v508 = vadd.f32 %v391, %v507
    %v509 = vpop.f32.mrf.mxu0
    %v510 = vpop.f32.mrf.mxu0
    %v511 = vadd.f32 %v391, %v510
    %v512 = vpop.f32.mrf.mxu0
    %513 = vmatprep.mubr.bf16.mxu0 0
    %514 = vmatmul.mubr.bf16.gmra.mxu0 %v359
    %v515 = vpop.f32.mrf.mxu0
    %v516 = vadd.f32 %v391, %v515
    %v517 = vpop.f32.mrf.mxu0
    %v518 = vpop.f32.mrf.mxu0
    %v519 = vadd.f32 %v391, %v518
    %v520 = vpop.f32.mrf.mxu0
    %521 = vmatprep.mubr.bf16.mxu0 0
    %522 = vmatmul.mubr.bf16.gmra.mxu0 %v360
    %v523 = vpop.f32.mrf.mxu0
    %v524 = vadd.f32 %v391, %v523
    %v525 = vpop.f32.mrf.mxu0
    %v526 = vpop.f32.mrf.mxu0
    %v527 = vadd.f32 %v391, %v526
    %v528 = vpop.f32.mrf.mxu0
    %529 = vmatprep.mubr.bf16.mxu0 0
    %530 = vmatmul.mubr.bf16.gmra.mxu0 %v361
    %v531 = vpop.f32.mrf.mxu0
    %v532 = vadd.f32 %v391, %v531
    %v533 = vpop.f32.mrf.mxu0
    %v534 = vpop.f32.mrf.mxu0
    %v535 = vadd.f32 %v391, %v534
    %v536 = vpop.f32.mrf.mxu0
    %537 = vmatprep.mubr.bf16.mxu0 0
    %538 = vmatmul.mubr.bf16.gmra.mxu0 %v362
    %v539 = vpop.f32.mrf.mxu0
    %v540 = vadd.f32 %v391, %v539
    %v541 = vpop.f32.mrf.mxu0
    %v542 = vpop.f32.mrf.mxu0
    %v543 = vadd.f32 %v391, %v542
    %v544 = vpop.f32.mrf.mxu0
    %545 = vmatprep.mubr.bf16.mxu0 0
    %546 = vmatmul.mubr.bf16.gmra.mxu0 %v363
    %v547 = vpop.f32.mrf.mxu0
    %v548 = vadd.f32 %v391, %v547
    %v549 = vpop.f32.mrf.mxu0
    %v550 = vpop.f32.mrf.mxu0
    %v551 = vadd.f32 %v391, %v550
    %v552 = vpop.f32.mrf.mxu0
    %553 = vmatprep.mubr.bf16.mxu0 0
    %554 = vmatmul.mubr.bf16.gmra.mxu0 %v364
    %v555 = vpop.f32.mrf.mxu0
    %v556 = vadd.f32 %v391, %v555
    %v557 = vpop.f32.mrf.mxu0
    %v558 = vpop.f32.mrf.mxu0
    %v559 = vadd.f32 %v391, %v558
    %v560 = vpop.f32.mrf.mxu0
    %561 = vmatprep.mubr.bf16.mxu0 0
    %562 = vmatmul.mubr.bf16.gmra.mxu0 %v365
    %v563 = vpop.f32.mrf.mxu0
    %v564 = vadd.f32 %v391, %v563
    %v565 = vpop.f32.mrf.mxu0
    %v566 = vpop.f32.mrf.mxu0
    %v567 = vadd.f32 %v391, %v566
    %v568 = vpop.f32.mrf.mxu0
    %569 = vmatprep.mubr.bf16.mxu0 0
    %570 = vmatmul.mubr.bf16.gmra.mxu0 %v366
    %v571 = vpop.f32.mrf.mxu0
    %v572 = vadd.f32 %v391, %v571
    %v573 = vpop.f32.mrf.mxu0
    %v574 = vpop.f32.mrf.mxu0
    %v575 = vadd.f32 %v391, %v574
    %v576 = vpop.f32.mrf.mxu0
    %577 = vmatprep.mubr.bf16.mxu0 0
    %578 = vmatmul.mubr.bf16.gmra.mxu0 %v367
    %v579 = vpop.f32.mrf.mxu0
    %v580 = vadd.f32 %v391, %v579
    %v581 = vpop.f32.mrf.mxu0
    %v582 = vpop.f32.mrf.mxu0
    %v583 = vadd.f32 %v391, %v582
    %v584 = vpop.f32.mrf.mxu0
    %585 = vmatprep.mubr.bf16.mxu0 0
    %586 = vmatmul.mubr.bf16.gmra.mxu0 %v368
    %v587 = vpop.f32.mrf.mxu0
    %v588 = vadd.f32 %v391, %v587
    %v589 = vpop.f32.mrf.mxu0
    %v590 = vpop.f32.mrf.mxu0
    %v591 = vadd.f32 %v391, %v590
    %v592 = vpop.f32.mrf.mxu0
    %593 = vmatprep.mubr.bf16.mxu0 0
    %594 = vmatmul.mubr.bf16.gmra.mxu0 %v369
    %v595 = vpop.f32.mrf.mxu0
    %v596 = vadd.f32 %v391, %v595
    %v597 = vpop.f32.mrf.mxu0
    %v598 = vpop.f32.mrf.mxu0
    %v599 = vadd.f32 %v391, %v598
    %v600 = vpop.f32.mrf.mxu0
    %601 = vdwg.mxu0
    %v602 = vmax.f32 %v476, 0.0
    %v603 = vmax.f32 %v479, 0.0
    %v604 = vmax.f32 %v484, 0.0
    %v605 = vmax.f32 %v487, 0.0
    %v606 = vmax.f32 %v492, 0.0
    %v607 = vmax.f32 %v495, 0.0
    %v608 = vmax.f32 %v500, 0.0
    %v609 = vmax.f32 %v503, 0.0
    %v610 = vmax.f32 %v508, 0.0
    %v611 = vmax.f32 %v511, 0.0
    %v612 = vmax.f32 %v516, 0.0
    %v613 = vmax.f32 %v519, 0.0
    %v614 = vmax.f32 %v524, 0.0
    %v615 = vmax.f32 %v527, 0.0
    %v616 = vmax.f32 %v532, 0.0
    %v617 = vmax.f32 %v535, 0.0
    %v618 = vmax.f32 %v540, 0.0
    %v619 = vmax.f32 %v543, 0.0
    %v620 = vmax.f32 %v548, 0.0
    %v621 = vmax.f32 %v551, 0.0
    %v622 = vmax.f32 %v556, 0.0
    %v623 = vmax.f32 %v559, 0.0
    %v624 = vmax.f32 %v564, 0.0
    %v625 = vmax.f32 %v567, 0.0
    %v626 = vmax.f32 %v572, 0.0
    %v627 = vmax.f32 %v575, 0.0
    %v628 = vmax.f32 %v580, 0.0
    %v629 = vmax.f32 %v583, 0.0
    %v630 = vmax.f32 %v588, 0.0
    %v631 = vmax.f32 %v591, 0.0
    %v632 = vmax.f32 %v596, 0.0
    %v633 = vmax.f32 %v599, 0.0
    %v634 = vpack.c.bf16 %v603, %v602
    %v635 = vpack.c.bf16 %v605, %v604
    %v636 = vpack.c.bf16 %v607, %v606
    %v637 = vpack.c.bf16 %v609, %v608
    %v638 = vpack.c.bf16 %v611, %v610
    %v639 = vpack.c.bf16 %v613, %v612
    %v640 = vpack.c.bf16 %v615, %v614
    %v641 = vpack.c.bf16 %v617, %v616
    %v642 = vpack.c.bf16 %v619, %v618
    %v643 = vpack.c.bf16 %v621, %v620
    %v644 = vpack.c.bf16 %v623, %v622
    %v645 = vpack.c.bf16 %v625, %v624
    %v646 = vpack.c.bf16 %v627, %v626
    %v647 = vpack.c.bf16 %v629, %v628
    %v648 = vpack.c.bf16 %v631, %v630
    %v649 = vpack.c.bf16 %v633, %v632
    %s650 = scalar_lea.vmem [#allocation2], 64
    %v651 = vld [vmem:[%s650] sm:$0xf]
    %v652 = vld [vmem:[%s650 + $0x4] sm:$0xf]
    %v653 = vld [vmem:[%s650 + $0x8] sm:$0xf]
    %v654 = vld [vmem:[%s650 + $0xc] sm:$0xf]
    %v655 = vld [vmem:[%s650 + $0x10] sm:$0xf]
    %v656 = vld [vmem:[%s650 + $0x14] sm:$0xf]
    %v657 = vld [vmem:[%s650 + $0x18] sm:$0xf]
    %v658 = vld [vmem:[%s650 + $0x1c] sm:$0xf]
    %v659 = vld [vmem:[%s650 + $0x20] sm:$0xf]
    %v660 = vld [vmem:[%s650 + $0x24] sm:$0xf]
    %v661 = vld [vmem:[%s650 + $0x28] sm:$0xf]
    %v662 = vld [vmem:[%s650 + $0x2c] sm:$0xf]
    %v663 = vld [vmem:[%s650 + $0x30] sm:$0xf]
    %v664 = vld [vmem:[%s650 + $0x34] sm:$0xf]
    %v665 = vld [vmem:[%s650 + $0x38] sm:$0xf]
    %v666 = vld [vmem:[%s650 + $0x3c] sm:$0xf]
    %s667 = scalar_lea.vmem %s4, 1
    %v668 = vld [vmem:[%s667] sm:$0x1]
    %v670 = vlaneseq
    %v671 = vshrl.u32 %v670, 7
    %v672 = vsub.s32 0, %v671
    %v673 = vrot.slane %v668, %v672
    %v691 = vunpack.c.l.b16 %v651
    %v692 = vunpack.c.l.b16 %v652
    %v693 = vunpack.c.l.b16 %v653
    %v694 = vunpack.c.l.b16 %v654
    %v695 = vunpack.c.l.b16 %v655
    %v696 = vunpack.c.l.b16 %v656
    %v697 = vunpack.c.l.b16 %v657
    %v698 = vunpack.c.l.b16 %v658
    %v699 = vunpack.c.l.b16 %v659
    %v700 = vunpack.c.l.b16 %v660
    %v701 = vunpack.c.l.b16 %v661
    %v702 = vunpack.c.l.b16 %v662
    %v703 = vunpack.c.l.b16 %v663
    %v704 = vunpack.c.l.b16 %v664
    %v705 = vunpack.c.l.b16 %v665
    %v706 = vunpack.c.l.b16 %v666
    %v707 = vpack.c.b16 %v692, %v691
    %v708 = vpack.c.b16 %v694, %v693
    %v709 = vpack.c.b16 %v696, %v695
    %v710 = vpack.c.b16 %v698, %v697
    %v711 = vpack.c.b16 %v700, %v699
    %v712 = vpack.c.b16 %v702, %v701
    %v713 = vpack.c.b16 %v704, %v703
    %v714 = vpack.c.b16 %v706, %v705
    %723 = vmatprep.subr.bf16.mxu0 0
    %724 = vmatpush1.bf16.msra.mxu0 %v714
    %725 = vmatprep.subr.bf16.mxu0 0
    %726 = vmatpush1.bf16.msra.mxu0 %v713
    %727 = vmatprep.subr.bf16.mxu0 0
    %728 = vmatpush1.bf16.msra.mxu0 %v712
    %729 = vmatprep.subr.bf16.mxu0 0
    %730 = vmatpush1.bf16.msra.mxu0 %v711
    %731 = vmatprep.subr.bf16.mxu0 0
    %732 = vmatpush1.bf16.msra.mxu0 %v710
    %733 = vmatprep.subr.bf16.mxu0 0
    %734 = vmatpush1.bf16.msra.mxu0 %v709
    %735 = vmatprep.subr.bf16.mxu0 0
    %736 = vmatpush1.bf16.msra.mxu0 %v708
    %737 = vmatprep.subr.bf16.mxu0 0
    %738 = vmatpush1.bf16.msra.mxu0 %v707
    %739 = vmatprep.subr.bf16.mxu0 0
    %740 = vmatpush2.bf16.msra.mxu0 0
    %741 = vmatprep.subr.bf16.mxu0 0
    %742 = vmatpush2.bf16.msra.mxu0 0
    %743 = vmatprep.subr.bf16.mxu0 0
    %744 = vmatpush2.bf16.msra.mxu0 0
    %745 = vmatprep.subr.bf16.mxu0 0
    %746 = vmatpush2.bf16.msra.mxu0 0
    %747 = vmatprep.subr.bf16.mxu0 0
    %748 = vmatpush2.bf16.msra.mxu0 0
    %749 = vmatprep.subr.bf16.mxu0 0
    %750 = vmatpush2.bf16.msra.mxu0 0
    %751 = vmatprep.subr.bf16.mxu0 0
    %752 = vmatpush2.bf16.msra.mxu0 0
    %753 = vmatprep.subr.bf16.mxu0 0
    %754 = vmatpush2.bf16.msra.mxu0 0
    %755 = vmatprep.mubr.bf16.mxu0 0
    %756 = vmatmul.mubr.bf16.gmra.mxu0 %v634
    %v757 = vpop.f32.mrf.mxu0
    %v758 = vadd.f32 %v673, %v757
    %v759 = vpop.f32.mrf.mxu0
    %v760 = vpop.f32.mrf.mxu0
    %v761 = vadd.f32 %v673, %v760
    %v762 = vpop.f32.mrf.mxu0
    %763 = vmatprep.mubr.bf16.mxu0 0
    %764 = vmatmul.mubr.bf16.gmra.mxu0 %v635
    %v765 = vpop.f32.mrf.mxu0
    %v766 = vadd.f32 %v673, %v765
    %v767 = vpop.f32.mrf.mxu0
    %v768 = vpop.f32.mrf.mxu0
    %v769 = vadd.f32 %v673, %v768
    %v770 = vpop.f32.mrf.mxu0
    %771 = vmatprep.mubr.bf16.mxu0 0
    %772 = vmatmul.mubr.bf16.gmra.mxu0 %v636
    %v773 = vpop.f32.mrf.mxu0
    %v774 = vadd.f32 %v673, %v773
    %v775 = vpop.f32.mrf.mxu0
    %v776 = vpop.f32.mrf.mxu0
    %v777 = vadd.f32 %v673, %v776
    %v778 = vpop.f32.mrf.mxu0
    %779 = vmatprep.mubr.bf16.mxu0 0
    %780 = vmatmul.mubr.bf16.gmra.mxu0 %v637
    %v781 = vpop.f32.mrf.mxu0
    %v782 = vadd.f32 %v673, %v781
    %v783 = vpop.f32.mrf.mxu0
    %v784 = vpop.f32.mrf.mxu0
    %v785 = vadd.f32 %v673, %v784
    %v786 = vpop.f32.mrf.mxu0
    %787 = vmatprep.mubr.bf16.mxu0 0
    %788 = vmatmul.mubr.bf16.gmra.mxu0 %v638
    %v789 = vpop.f32.mrf.mxu0
    %v790 = vadd.f32 %v673, %v789
    %v791 = vpop.f32.mrf.mxu0
    %v792 = vpop.f32.mrf.mxu0
    %v793 = vadd.f32 %v673, %v792
    %v794 = vpop.f32.mrf.mxu0
    %795 = vmatprep.mubr.bf16.mxu0 0
    %796 = vmatmul.mubr.bf16.gmra.mxu0 %v639
    %v797 = vpop.f32.mrf.mxu0
    %v798 = vadd.f32 %v673, %v797
    %v799 = vpop.f32.mrf.mxu0
    %v800 = vpop.f32.mrf.mxu0
    %v801 = vadd.f32 %v673, %v800
    %v802 = vpop.f32.mrf.mxu0
    %803 = vmatprep.mubr.bf16.mxu0 0
    %804 = vmatmul.mubr.bf16.gmra.mxu0 %v640
    %v805 = vpop.f32.mrf.mxu0
    %v806 = vadd.f32 %v673, %v805
    %v807 = vpop.f32.mrf.mxu0
    %v808 = vpop.f32.mrf.mxu0
    %v809 = vadd.f32 %v673, %v808
    %v810 = vpop.f32.mrf.mxu0
    %811 = vmatprep.mubr.bf16.mxu0 0
    %812 = vmatmul.mubr.bf16.gmra.mxu0 %v641
    %v813 = vpop.f32.mrf.mxu0
    %v814 = vadd.f32 %v673, %v813
    %v815 = vpop.f32.mrf.mxu0
    %v816 = vpop.f32.mrf.mxu0
    %v817 = vadd.f32 %v673, %v816
    %v818 = vpop.f32.mrf.mxu0
    %819 = vmatprep.mubr.bf16.mxu0 0
    %820 = vmatmul.mubr.bf16.gmra.mxu0 %v642
    %v821 = vpop.f32.mrf.mxu0
    %v822 = vadd.f32 %v673, %v821
    %v823 = vpop.f32.mrf.mxu0
    %v824 = vpop.f32.mrf.mxu0
    %v825 = vadd.f32 %v673, %v824
    %v826 = vpop.f32.mrf.mxu0
    %827 = vmatprep.mubr.bf16.mxu0 0
    %828 = vmatmul.mubr.bf16.gmra.mxu0 %v643
    %v829 = vpop.f32.mrf.mxu0
    %v830 = vadd.f32 %v673, %v829
    %v831 = vpop.f32.mrf.mxu0
    %v832 = vpop.f32.mrf.mxu0
    %v833 = vadd.f32 %v673, %v832
    %v834 = vpop.f32.mrf.mxu0
    %835 = vmatprep.mubr.bf16.mxu0 0
    %836 = vmatmul.mubr.bf16.gmra.mxu0 %v644
    %v837 = vpop.f32.mrf.mxu0
    %v838 = vadd.f32 %v673, %v837
    %v839 = vpop.f32.mrf.mxu0
    %v840 = vpop.f32.mrf.mxu0
    %v841 = vadd.f32 %v673, %v840
    %v842 = vpop.f32.mrf.mxu0
    %843 = vmatprep.mubr.bf16.mxu0 0
    %844 = vmatmul.mubr.bf16.gmra.mxu0 %v645
    %v845 = vpop.f32.mrf.mxu0
    %v846 = vadd.f32 %v673, %v845
    %v847 = vpop.f32.mrf.mxu0
    %v848 = vpop.f32.mrf.mxu0
    %v849 = vadd.f32 %v673, %v848
    %v850 = vpop.f32.mrf.mxu0
    %851 = vmatprep.mubr.bf16.mxu0 0
    %852 = vmatmul.mubr.bf16.gmra.mxu0 %v646
    %v853 = vpop.f32.mrf.mxu0
    %v854 = vadd.f32 %v673, %v853
    %v855 = vpop.f32.mrf.mxu0
    %v856 = vpop.f32.mrf.mxu0
    %v857 = vadd.f32 %v673, %v856
    %v858 = vpop.f32.mrf.mxu0
    %859 = vmatprep.mubr.bf16.mxu0 0
    %860 = vmatmul.mubr.bf16.gmra.mxu0 %v647
    %v861 = vpop.f32.mrf.mxu0
    %v862 = vadd.f32 %v673, %v861
    %v863 = vpop.f32.mrf.mxu0
    %v864 = vpop.f32.mrf.mxu0
    %v865 = vadd.f32 %v673, %v864
    %v866 = vpop.f32.mrf.mxu0
    %867 = vmatprep.mubr.bf16.mxu0 0
    %868 = vmatmul.mubr.bf16.gmra.mxu0 %v648
    %v869 = vpop.f32.mrf.mxu0
    %v870 = vadd.f32 %v673, %v869
    %v871 = vpop.f32.mrf.mxu0
    %v872 = vpop.f32.mrf.mxu0
    %v873 = vadd.f32 %v673, %v872
    %v874 = vpop.f32.mrf.mxu0
    %875 = vmatprep.mubr.bf16.mxu0 0
    %876 = vmatmul.mubr.bf16.gmra.mxu0 %v649
    %v877 = vpop.f32.mrf.mxu0
    %v878 = vadd.f32 %v673, %v877
    %v879 = vpop.f32.mrf.mxu0
    %v880 = vpop.f32.mrf.mxu0
    %v881 = vadd.f32 %v673, %v880
    %v882 = vpop.f32.mrf.mxu0
    %883 = vdwg.mxu0
    %v884 = vmax.f32 %v758, 0.0
    %v885 = vmax.f32 %v761, 0.0
    %v886 = vmax.f32 %v766, 0.0
    %v887 = vmax.f32 %v769, 0.0
    %v888 = vmax.f32 %v774, 0.0
    %v889 = vmax.f32 %v777, 0.0
    %v890 = vmax.f32 %v782, 0.0
    %v891 = vmax.f32 %v785, 0.0
    %v892 = vmax.f32 %v790, 0.0
    %v893 = vmax.f32 %v793, 0.0
    %v894 = vmax.f32 %v798, 0.0
    %v895 = vmax.f32 %v801, 0.0
    %v896 = vmax.f32 %v806, 0.0
    %v897 = vmax.f32 %v809, 0.0
    %v898 = vmax.f32 %v814, 0.0
    %v899 = vmax.f32 %v817, 0.0
    %v900 = vmax.f32 %v822, 0.0
    %v901 = vmax.f32 %v825, 0.0
    %v902 = vmax.f32 %v830, 0.0
    %v903 = vmax.f32 %v833, 0.0
    %v904 = vmax.f32 %v838, 0.0
    %v905 = vmax.f32 %v841, 0.0
    %v906 = vmax.f32 %v846, 0.0
    %v907 = vmax.f32 %v849, 0.0
    %v908 = vmax.f32 %v854, 0.0
    %v909 = vmax.f32 %v857, 0.0
    %v910 = vmax.f32 %v862, 0.0
    %v911 = vmax.f32 %v865, 0.0
    %v912 = vmax.f32 %v870, 0.0
    %v913 = vmax.f32 %v873, 0.0
    %v914 = vmax.f32 %v878, 0.0
    %v915 = vmax.f32 %v881, 0.0
    %v916 = vpack.c.bf16 %v885, %v884
    %v917 = vpack.c.bf16 %v887, %v886
    %v918 = vpack.c.bf16 %v889, %v888
    %v919 = vpack.c.bf16 %v891, %v890
    %v920 = vpack.c.bf16 %v893, %v892
    %v921 = vpack.c.bf16 %v895, %v894
    %v922 = vpack.c.bf16 %v897, %v896
    %v923 = vpack.c.bf16 %v899, %v898
    %v924 = vpack.c.bf16 %v901, %v900
    %v925 = vpack.c.bf16 %v903, %v902
    %v926 = vpack.c.bf16 %v905, %v904
    %v927 = vpack.c.bf16 %v907, %v906
    %v928 = vpack.c.bf16 %v909, %v908
    %v929 = vpack.c.bf16 %v911, %v910
    %v930 = vpack.c.bf16 %v913, %v912
    %v931 = vpack.c.bf16 %v915, %v914
    %s932 = scalar_lea.vmem [#allocation2], 128
    %v933 = vld [vmem:[%s932] sm:$0xf]
    %v934 = vld [vmem:[%s932 + $0x4] sm:$0xf]
    %v935 = vld [vmem:[%s932 + $0x8] sm:$0xf]
    %v936 = vld [vmem:[%s932 + $0xc] sm:$0xf]
    %v937 = vld [vmem:[%s932 + $0x10] sm:$0xf]
    %v938 = vld [vmem:[%s932 + $0x14] sm:$0xf]
    %v939 = vld [vmem:[%s932 + $0x18] sm:$0xf]
    %v940 = vld [vmem:[%s932 + $0x1c] sm:$0xf]
    %v941 = vld [vmem:[%s932 + $0x20] sm:$0xf]
    %v942 = vld [vmem:[%s932 + $0x24] sm:$0xf]
    %v943 = vld [vmem:[%s932 + $0x28] sm:$0xf]
    %v944 = vld [vmem:[%s932 + $0x2c] sm:$0xf]
    %v945 = vld [vmem:[%s932 + $0x30] sm:$0xf]
    %v946 = vld [vmem:[%s932 + $0x34] sm:$0xf]
    %v947 = vld [vmem:[%s932 + $0x38] sm:$0xf]
    %v948 = vld [vmem:[%s932 + $0x3c] sm:$0xf]
    %s949 = scalar_lea.vmem %s4, 2
    %v950 = vld [vmem:[%s949] sm:$0x1]
    %v952 = vlaneseq
    %v953 = vshrl.u32 %v952, 7
    %v954 = vsub.s32 0, %v953
    %v955 = vrot.slane %v950, %v954
    %v973 = vunpack.c.l.b16 %v933
    %v974 = vunpack.c.l.b16 %v934
    %v975 = vunpack.c.l.b16 %v935
    %v976 = vunpack.c.l.b16 %v936
    %v977 = vunpack.c.l.b16 %v937
    %v978 = vunpack.c.l.b16 %v938
    %v979 = vunpack.c.l.b16 %v939
    %v980 = vunpack.c.l.b16 %v940
    %v981 = vunpack.c.l.b16 %v941
    %v982 = vunpack.c.l.b16 %v942
    %v983 = vunpack.c.l.b16 %v943
    %v984 = vunpack.c.l.b16 %v944
    %v985 = vunpack.c.l.b16 %v945
    %v986 = vunpack.c.l.b16 %v946
    %v987 = vunpack.c.l.b16 %v947
    %v988 = vunpack.c.l.b16 %v948
    %v989 = vpack.c.b16 %v974, %v973
    %v990 = vpack.c.b16 %v976, %v975
    %v991 = vpack.c.b16 %v978, %v977
    %v992 = vpack.c.b16 %v980, %v979
    %v993 = vpack.c.b16 %v982, %v981
    %v994 = vpack.c.b16 %v984, %v983
    %v995 = vpack.c.b16 %v986, %v985
    %v996 = vpack.c.b16 %v988, %v987
    %1005 = vmatprep.subr.bf16.mxu0 0
    %1006 = vmatpush1.bf16.msra.mxu0 %v996
    %1007 = vmatprep.subr.bf16.mxu0 0
    %1008 = vmatpush1.bf16.msra.mxu0 %v995
    %1009 = vmatprep.subr.bf16.mxu0 0
    %1010 = vmatpush1.bf16.msra.mxu0 %v994
    %1011 = vmatprep.subr.bf16.mxu0 0
    %1012 = vmatpush1.bf16.msra.mxu0 %v993
    %1013 = vmatprep.subr.bf16.mxu0 0
    %1014 = vmatpush1.bf16.msra.mxu0 %v992
    %1015 = vmatprep.subr.bf16.mxu0 0
    %1016 = vmatpush1.bf16.msra.mxu0 %v991
    %1017 = vmatprep.subr.bf16.mxu0 0
    %1018 = vmatpush1.bf16.msra.mxu0 %v990
    %1019 = vmatprep.subr.bf16.mxu0 0
    %1020 = vmatpush1.bf16.msra.mxu0 %v989
    %1021 = vmatprep.subr.bf16.mxu0 0
    %1022 = vmatpush2.bf16.msra.mxu0 0
    %1023 = vmatprep.subr.bf16.mxu0 0
    %1024 = vmatpush2.bf16.msra.mxu0 0
    %1025 = vmatprep.subr.bf16.mxu0 0
    %1026 = vmatpush2.bf16.msra.mxu0 0
    %1027 = vmatprep.subr.bf16.mxu0 0
    %1028 = vmatpush2.bf16.msra.mxu0 0
    %1029 = vmatprep.subr.bf16.mxu0 0
    %1030 = vmatpush2.bf16.msra.mxu0 0
    %1031 = vmatprep.subr.bf16.mxu0 0
    %1032 = vmatpush2.bf16.msra.mxu0 0
    %1033 = vmatprep.subr.bf16.mxu0 0
    %1034 = vmatpush2.bf16.msra.mxu0 0
    %1035 = vmatprep.subr.bf16.mxu0 0
    %1036 = vmatpush2.bf16.msra.mxu0 0
    %1037 = vmatprep.mubr.bf16.mxu0 0
    %1038 = vmatmul.mubr.bf16.gmra.mxu0 %v916
    %v1039 = vpop.f32.mrf.mxu0
    %v1040 = vadd.f32 %v955, %v1039
    %v1041 = vpop.f32.mrf.mxu0
    %v1042 = vpop.f32.mrf.mxu0
    %v1043 = vadd.f32 %v955, %v1042
    %v1044 = vpop.f32.mrf.mxu0
    %1045 = vmatprep.mubr.bf16.mxu0 0
    %1046 = vmatmul.mubr.bf16.gmra.mxu0 %v917
    %v1047 = vpop.f32.mrf.mxu0
    %v1048 = vadd.f32 %v955, %v1047
    %v1049 = vpop.f32.mrf.mxu0
    %v1050 = vpop.f32.mrf.mxu0
    %v1051 = vadd.f32 %v955, %v1050
    %v1052 = vpop.f32.mrf.mxu0
    %1053 = vmatprep.mubr.bf16.mxu0 0
    %1054 = vmatmul.mubr.bf16.gmra.mxu0 %v918
    %v1055 = vpop.f32.mrf.mxu0
    %v1056 = vadd.f32 %v955, %v1055
    %v1057 = vpop.f32.mrf.mxu0
    %v1058 = vpop.f32.mrf.mxu0
    %v1059 = vadd.f32 %v955, %v1058
    %v1060 = vpop.f32.mrf.mxu0
    %1061 = vmatprep.mubr.bf16.mxu0 0
    %1062 = vmatmul.mubr.bf16.gmra.mxu0 %v919
    %v1063 = vpop.f32.mrf.mxu0
    %v1064 = vadd.f32 %v955, %v1063
    %v1065 = vpop.f32.mrf.mxu0
    %v1066 = vpop.f32.mrf.mxu0
    %v1067 = vadd.f32 %v955, %v1066
    %v1068 = vpop.f32.mrf.mxu0
    %1069 = vmatprep.mubr.bf16.mxu0 0
    %1070 = vmatmul.mubr.bf16.gmra.mxu0 %v920
    %v1071 = vpop.f32.mrf.mxu0
    %v1072 = vadd.f32 %v955, %v1071
    %v1073 = vpop.f32.mrf.mxu0
    %v1074 = vpop.f32.mrf.mxu0
    %v1075 = vadd.f32 %v955, %v1074
    %v1076 = vpop.f32.mrf.mxu0
    %1077 = vmatprep.mubr.bf16.mxu0 0
    %1078 = vmatmul.mubr.bf16.gmra.mxu0 %v921
    %v1079 = vpop.f32.mrf.mxu0
    %v1080 = vadd.f32 %v955, %v1079
    %v1081 = vpop.f32.mrf.mxu0
    %v1082 = vpop.f32.mrf.mxu0
    %v1083 = vadd.f32 %v955, %v1082
    %v1084 = vpop.f32.mrf.mxu0
    %1085 = vmatprep.mubr.bf16.mxu0 0
    %1086 = vmatmul.mubr.bf16.gmra.mxu0 %v922
    %v1087 = vpop.f32.mrf.mxu0
    %v1088 = vadd.f32 %v955, %v1087
    %v1089 = vpop.f32.mrf.mxu0
    %v1090 = vpop.f32.mrf.mxu0
    %v1091 = vadd.f32 %v955, %v1090
    %v1092 = vpop.f32.mrf.mxu0
    %1093 = vmatprep.mubr.bf16.mxu0 0
    %1094 = vmatmul.mubr.bf16.gmra.mxu0 %v923
    %v1095 = vpop.f32.mrf.mxu0
    %v1096 = vadd.f32 %v955, %v1095
    %v1097 = vpop.f32.mrf.mxu0
    %v1098 = vpop.f32.mrf.mxu0
    %v1099 = vadd.f32 %v955, %v1098
    %v1100 = vpop.f32.mrf.mxu0
    %1101 = vmatprep.mubr.bf16.mxu0 0
    %1102 = vmatmul.mubr.bf16.gmra.mxu0 %v924
    %v1103 = vpop.f32.mrf.mxu0
    %v1104 = vadd.f32 %v955, %v1103
    %v1105 = vpop.f32.mrf.mxu0
    %v1106 = vpop.f32.mrf.mxu0
    %v1107 = vadd.f32 %v955, %v1106
    %v1108 = vpop.f32.mrf.mxu0
    %1109 = vmatprep.mubr.bf16.mxu0 0
    %1110 = vmatmul.mubr.bf16.gmra.mxu0 %v925
    %v1111 = vpop.f32.mrf.mxu0
    %v1112 = vadd.f32 %v955, %v1111
    %v1113 = vpop.f32.mrf.mxu0
    %v1114 = vpop.f32.mrf.mxu0
    %v1115 = vadd.f32 %v955, %v1114
    %v1116 = vpop.f32.mrf.mxu0
    %1117 = vmatprep.mubr.bf16.mxu0 0
    %1118 = vmatmul.mubr.bf16.gmra.mxu0 %v926
    %v1119 = vpop.f32.mrf.mxu0
    %v1120 = vadd.f32 %v955, %v1119
    %v1121 = vpop.f32.mrf.mxu0
    %v1122 = vpop.f32.mrf.mxu0
    %v1123 = vadd.f32 %v955, %v1122
    %v1124 = vpop.f32.mrf.mxu0
    %1125 = vmatprep.mubr.bf16.mxu0 0
    %1126 = vmatmul.mubr.bf16.gmra.mxu0 %v927
    %v1127 = vpop.f32.mrf.mxu0
    %v1128 = vadd.f32 %v955, %v1127
    %v1129 = vpop.f32.mrf.mxu0
    %v1130 = vpop.f32.mrf.mxu0
    %v1131 = vadd.f32 %v955, %v1130
    %v1132 = vpop.f32.mrf.mxu0
    %1133 = vmatprep.mubr.bf16.mxu0 0
    %1134 = vmatmul.mubr.bf16.gmra.mxu0 %v928
    %v1135 = vpop.f32.mrf.mxu0
    %v1136 = vadd.f32 %v955, %v1135
    %v1137 = vpop.f32.mrf.mxu0
    %v1138 = vpop.f32.mrf.mxu0
    %v1139 = vadd.f32 %v955, %v1138
    %v1140 = vpop.f32.mrf.mxu0
    %1141 = vmatprep.mubr.bf16.mxu0 0
    %1142 = vmatmul.mubr.bf16.gmra.mxu0 %v929
    %v1143 = vpop.f32.mrf.mxu0
    %v1144 = vadd.f32 %v955, %v1143
    %v1145 = vpop.f32.mrf.mxu0
    %v1146 = vpop.f32.mrf.mxu0
    %v1147 = vadd.f32 %v955, %v1146
    %v1148 = vpop.f32.mrf.mxu0
    %1149 = vmatprep.mubr.bf16.mxu0 0
    %1150 = vmatmul.mubr.bf16.gmra.mxu0 %v930
    %v1151 = vpop.f32.mrf.mxu0
    %v1152 = vadd.f32 %v955, %v1151
    %v1153 = vpop.f32.mrf.mxu0
    %v1154 = vpop.f32.mrf.mxu0
    %v1155 = vadd.f32 %v955, %v1154
    %v1156 = vpop.f32.mrf.mxu0
    %1157 = vmatprep.mubr.bf16.mxu0 0
    %1158 = vmatmul.mubr.bf16.gmra.mxu0 %v931
    %v1159 = vpop.f32.mrf.mxu0
    %v1160 = vadd.f32 %v955, %v1159
    %v1161 = vpop.f32.mrf.mxu0
    %v1162 = vpop.f32.mrf.mxu0
    %v1163 = vadd.f32 %v955, %v1162
    %v1164 = vpop.f32.mrf.mxu0
    %1165 = vdwg.mxu0
    %v1166 = vmax.f32 %v1040, 0.0
    %v1167 = vmax.f32 %v1043, 0.0
    %v1168 = vmax.f32 %v1048, 0.0
    %v1169 = vmax.f32 %v1051, 0.0
    %v1170 = vmax.f32 %v1056, 0.0
    %v1171 = vmax.f32 %v1059, 0.0
    %v1172 = vmax.f32 %v1064, 0.0
    %v1173 = vmax.f32 %v1067, 0.0
    %v1174 = vmax.f32 %v1072, 0.0
    %v1175 = vmax.f32 %v1075, 0.0
    %v1176 = vmax.f32 %v1080, 0.0
    %v1177 = vmax.f32 %v1083, 0.0
    %v1178 = vmax.f32 %v1088, 0.0
    %v1179 = vmax.f32 %v1091, 0.0
    %v1180 = vmax.f32 %v1096, 0.0
    %v1181 = vmax.f32 %v1099, 0.0
    %v1182 = vmax.f32 %v1104, 0.0
    %v1183 = vmax.f32 %v1107, 0.0
    %v1184 = vmax.f32 %v1112, 0.0
    %v1185 = vmax.f32 %v1115, 0.0
    %v1186 = vmax.f32 %v1120, 0.0
    %v1187 = vmax.f32 %v1123, 0.0
    %v1188 = vmax.f32 %v1128, 0.0
    %v1189 = vmax.f32 %v1131, 0.0
    %v1190 = vmax.f32 %v1136, 0.0
    %v1191 = vmax.f32 %v1139, 0.0
    %v1192 = vmax.f32 %v1144, 0.0
    %v1193 = vmax.f32 %v1147, 0.0
    %v1194 = vmax.f32 %v1152, 0.0
    %v1195 = vmax.f32 %v1155, 0.0
    %v1196 = vmax.f32 %v1160, 0.0
    %v1197 = vmax.f32 %v1163, 0.0
    %v1198 = vpack.c.bf16 %v1167, %v1166
    %v1199 = vpack.c.bf16 %v1169, %v1168
    %v1200 = vpack.c.bf16 %v1171, %v1170
    %v1201 = vpack.c.bf16 %v1173, %v1172
    %v1202 = vpack.c.bf16 %v1175, %v1174
    %v1203 = vpack.c.bf16 %v1177, %v1176
    %v1204 = vpack.c.bf16 %v1179, %v1178
    %v1205 = vpack.c.bf16 %v1181, %v1180
    %v1206 = vpack.c.bf16 %v1183, %v1182
    %v1207 = vpack.c.bf16 %v1185, %v1184
    %v1208 = vpack.c.bf16 %v1187, %v1186
    %v1209 = vpack.c.bf16 %v1189, %v1188
    %v1210 = vpack.c.bf16 %v1191, %v1190
    %v1211 = vpack.c.bf16 %v1193, %v1192
    %v1212 = vpack.c.bf16 %v1195, %v1194
    %v1213 = vpack.c.bf16 %v1197, %v1196
    %s1214 = scalar_lea.vmem [#allocation2], 192
    %v1215 = vld [vmem:[%s1214] sm:$0xf]
    %v1216 = vld [vmem:[%s1214 + $0x4] sm:$0xf]
    %v1217 = vld [vmem:[%s1214 + $0x8] sm:$0xf]
    %v1218 = vld [vmem:[%s1214 + $0xc] sm:$0xf]
    %v1219 = vld [vmem:[%s1214 + $0x10] sm:$0xf]
    %v1220 = vld [vmem:[%s1214 + $0x14] sm:$0xf]
    %v1221 = vld [vmem:[%s1214 + $0x18] sm:$0xf]
    %v1222 = vld [vmem:[%s1214 + $0x1c] sm:$0xf]
    %v1223 = vld [vmem:[%s1214 + $0x20] sm:$0xf]
    %v1224 = vld [vmem:[%s1214 + $0x24] sm:$0xf]
    %v1225 = vld [vmem:[%s1214 + $0x28] sm:$0xf]
    %v1226 = vld [vmem:[%s1214 + $0x2c] sm:$0xf]
    %v1227 = vld [vmem:[%s1214 + $0x30] sm:$0xf]
    %v1228 = vld [vmem:[%s1214 + $0x34] sm:$0xf]
    %v1229 = vld [vmem:[%s1214 + $0x38] sm:$0xf]
    %v1230 = vld [vmem:[%s1214 + $0x3c] sm:$0xf]
    %s1231 = scalar_lea.vmem %s4, 3
    %v1232 = vld [vmem:[%s1231] sm:$0x1]
    %v1234 = vlaneseq
    %v1235 = vshrl.u32 %v1234, 7
    %v1236 = vsub.s32 0, %v1235
    %v1237 = vrot.slane %v1232, %v1236
    %v1255 = vunpack.c.l.b16 %v1215
    %v1256 = vunpack.c.l.b16 %v1216
    %v1257 = vunpack.c.l.b16 %v1217
    %v1258 = vunpack.c.l.b16 %v1218
    %v1259 = vunpack.c.l.b16 %v1219
    %v1260 = vunpack.c.l.b16 %v1220
    %v1261 = vunpack.c.l.b16 %v1221
    %v1262 = vunpack.c.l.b16 %v1222
    %v1263 = vunpack.c.l.b16 %v1223
    %v1264 = vunpack.c.l.b16 %v1224
    %v1265 = vunpack.c.l.b16 %v1225
    %v1266 = vunpack.c.l.b16 %v1226
    %v1267 = vunpack.c.l.b16 %v1227
    %v1268 = vunpack.c.l.b16 %v1228
    %v1269 = vunpack.c.l.b16 %v1229
    %v1270 = vunpack.c.l.b16 %v1230
    %v1271 = vpack.c.b16 %v1256, %v1255
    %v1272 = vpack.c.b16 %v1258, %v1257
    %v1273 = vpack.c.b16 %v1260, %v1259
    %v1274 = vpack.c.b16 %v1262, %v1261
    %v1275 = vpack.c.b16 %v1264, %v1263
    %v1276 = vpack.c.b16 %v1266, %v1265
    %v1277 = vpack.c.b16 %v1268, %v1267
    %v1278 = vpack.c.b16 %v1270, %v1269
    %1287 = vmatprep.subr.bf16.mxu0 0
    %1288 = vmatpush1.bf16.msra.mxu0 %v1278
    %1289 = vmatprep.subr.bf16.mxu0 0
    %1290 = vmatpush1.bf16.msra.mxu0 %v1277
    %1291 = vmatprep.subr.bf16.mxu0 0
    %1292 = vmatpush1.bf16.msra.mxu0 %v1276
    %1293 = vmatprep.subr.bf16.mxu0 0
    %1294 = vmatpush1.bf16.msra.mxu0 %v1275
    %1295 = vmatprep.subr.bf16.mxu0 0
    %1296 = vmatpush1.bf16.msra.mxu0 %v1274
    %1297 = vmatprep.subr.bf16.mxu0 0
    %1298 = vmatpush1.bf16.msra.mxu0 %v1273
    %1299 = vmatprep.subr.bf16.mxu0 0
    %1300 = vmatpush1.bf16.msra.mxu0 %v1272
    %1301 = vmatprep.subr.bf16.mxu0 0
    %1302 = vmatpush1.bf16.msra.mxu0 %v1271
    %1303 = vmatprep.subr.bf16.mxu0 0
    %1304 = vmatpush2.bf16.msra.mxu0 0
    %1305 = vmatprep.subr.bf16.mxu0 0
    %1306 = vmatpush2.bf16.msra.mxu0 0
    %1307 = vmatprep.subr.bf16.mxu0 0
    %1308 = vmatpush2.bf16.msra.mxu0 0
    %1309 = vmatprep.subr.bf16.mxu0 0
    %1310 = vmatpush2.bf16.msra.mxu0 0
    %1311 = vmatprep.subr.bf16.mxu0 0
    %1312 = vmatpush2.bf16.msra.mxu0 0
    %1313 = vmatprep.subr.bf16.mxu0 0
    %1314 = vmatpush2.bf16.msra.mxu0 0
    %1315 = vmatprep.subr.bf16.mxu0 0
    %1316 = vmatpush2.bf16.msra.mxu0 0
    %1317 = vmatprep.subr.bf16.mxu0 0
    %1318 = vmatpush2.bf16.msra.mxu0 0
    %1319 = vmatprep.mubr.bf16.mxu0 0
    %1320 = vmatmul.mubr.bf16.gmra.mxu0 %v1198
    %v1321 = vpop.f32.mrf.mxu0
    %v1322 = vadd.f32 %v1237, %v1321
    %v1323 = vpop.f32.mrf.mxu0
    %v1324 = vpop.f32.mrf.mxu0
    %v1325 = vadd.f32 %v1237, %v1324
    %v1326 = vpop.f32.mrf.mxu0
    %1327 = vmatprep.mubr.bf16.mxu0 0
    %1328 = vmatmul.mubr.bf16.gmra.mxu0 %v1199
    %v1329 = vpop.f32.mrf.mxu0
    %v1330 = vadd.f32 %v1237, %v1329
    %v1331 = vpop.f32.mrf.mxu0
    %v1332 = vpop.f32.mrf.mxu0
    %v1333 = vadd.f32 %v1237, %v1332
    %v1334 = vpop.f32.mrf.mxu0
    %1335 = vmatprep.mubr.bf16.mxu0 0
    %1336 = vmatmul.mubr.bf16.gmra.mxu0 %v1200
    %v1337 = vpop.f32.mrf.mxu0
    %v1338 = vadd.f32 %v1237, %v1337
    %v1339 = vpop.f32.mrf.mxu0
    %v1340 = vpop.f32.mrf.mxu0
    %v1341 = vadd.f32 %v1237, %v1340
    %v1342 = vpop.f32.mrf.mxu0
    %1343 = vmatprep.mubr.bf16.mxu0 0
    %1344 = vmatmul.mubr.bf16.gmra.mxu0 %v1201
    %v1345 = vpop.f32.mrf.mxu0
    %v1346 = vadd.f32 %v1237, %v1345
    %v1347 = vpop.f32.mrf.mxu0
    %v1348 = vpop.f32.mrf.mxu0
    %v1349 = vadd.f32 %v1237, %v1348
    %v1350 = vpop.f32.mrf.mxu0
    %1351 = vmatprep.mubr.bf16.mxu0 0
    %1352 = vmatmul.mubr.bf16.gmra.mxu0 %v1202
    %v1353 = vpop.f32.mrf.mxu0
    %v1354 = vadd.f32 %v1237, %v1353
    %v1355 = vpop.f32.mrf.mxu0
    %v1356 = vpop.f32.mrf.mxu0
    %v1357 = vadd.f32 %v1237, %v1356
    %v1358 = vpop.f32.mrf.mxu0
    %1359 = vmatprep.mubr.bf16.mxu0 0
    %1360 = vmatmul.mubr.bf16.gmra.mxu0 %v1203
    %v1361 = vpop.f32.mrf.mxu0
    %v1362 = vadd.f32 %v1237, %v1361
    %v1363 = vpop.f32.mrf.mxu0
    %v1364 = vpop.f32.mrf.mxu0
    %v1365 = vadd.f32 %v1237, %v1364
    %v1366 = vpop.f32.mrf.mxu0
    %1367 = vmatprep.mubr.bf16.mxu0 0
    %1368 = vmatmul.mubr.bf16.gmra.mxu0 %v1204
    %v1369 = vpop.f32.mrf.mxu0
    %v1370 = vadd.f32 %v1237, %v1369
    %v1371 = vpop.f32.mrf.mxu0
    %v1372 = vpop.f32.mrf.mxu0
    %v1373 = vadd.f32 %v1237, %v1372
    %v1374 = vpop.f32.mrf.mxu0
    %1375 = vmatprep.mubr.bf16.mxu0 0
    %1376 = vmatmul.mubr.bf16.gmra.mxu0 %v1205
    %v1377 = vpop.f32.mrf.mxu0
    %v1378 = vadd.f32 %v1237, %v1377
    %v1379 = vpop.f32.mrf.mxu0
    %v1380 = vpop.f32.mrf.mxu0
    %v1381 = vadd.f32 %v1237, %v1380
    %v1382 = vpop.f32.mrf.mxu0
    %1383 = vmatprep.mubr.bf16.mxu0 0
    %1384 = vmatmul.mubr.bf16.gmra.mxu0 %v1206
    %v1385 = vpop.f32.mrf.mxu0
    %v1386 = vadd.f32 %v1237, %v1385
    %v1387 = vpop.f32.mrf.mxu0
    %v1388 = vpop.f32.mrf.mxu0
    %v1389 = vadd.f32 %v1237, %v1388
    %v1390 = vpop.f32.mrf.mxu0
    %1391 = vmatprep.mubr.bf16.mxu0 0
    %1392 = vmatmul.mubr.bf16.gmra.mxu0 %v1207
    %v1393 = vpop.f32.mrf.mxu0
    %v1394 = vadd.f32 %v1237, %v1393
    %v1395 = vpop.f32.mrf.mxu0
    %v1396 = vpop.f32.mrf.mxu0
    %v1397 = vadd.f32 %v1237, %v1396
    %v1398 = vpop.f32.mrf.mxu0
    %1399 = vmatprep.mubr.bf16.mxu0 0
    %1400 = vmatmul.mubr.bf16.gmra.mxu0 %v1208
    %v1401 = vpop.f32.mrf.mxu0
    %v1402 = vadd.f32 %v1237, %v1401
    %v1403 = vpop.f32.mrf.mxu0
    %v1404 = vpop.f32.mrf.mxu0
    %v1405 = vadd.f32 %v1237, %v1404
    %v1406 = vpop.f32.mrf.mxu0
    %1407 = vmatprep.mubr.bf16.mxu0 0
    %1408 = vmatmul.mubr.bf16.gmra.mxu0 %v1209
    %v1409 = vpop.f32.mrf.mxu0
    %v1410 = vadd.f32 %v1237, %v1409
    %v1411 = vpop.f32.mrf.mxu0
    %v1412 = vpop.f32.mrf.mxu0
    %v1413 = vadd.f32 %v1237, %v1412
    %v1414 = vpop.f32.mrf.mxu0
    %1415 = vmatprep.mubr.bf16.mxu0 0
    %1416 = vmatmul.mubr.bf16.gmra.mxu0 %v1210
    %v1417 = vpop.f32.mrf.mxu0
    %v1418 = vadd.f32 %v1237, %v1417
    %v1419 = vpop.f32.mrf.mxu0
    %v1420 = vpop.f32.mrf.mxu0
    %v1421 = vadd.f32 %v1237, %v1420
    %v1422 = vpop.f32.mrf.mxu0
    %1423 = vmatprep.mubr.bf16.mxu0 0
    %1424 = vmatmul.mubr.bf16.gmra.mxu0 %v1211
    %v1425 = vpop.f32.mrf.mxu0
    %v1426 = vadd.f32 %v1237, %v1425
    %v1427 = vpop.f32.mrf.mxu0
    %v1428 = vpop.f32.mrf.mxu0
    %v1429 = vadd.f32 %v1237, %v1428
    %v1430 = vpop.f32.mrf.mxu0
    %1431 = vmatprep.mubr.bf16.mxu0 0
    %1432 = vmatmul.mubr.bf16.gmra.mxu0 %v1212
    %v1433 = vpop.f32.mrf.mxu0
    %v1434 = vadd.f32 %v1237, %v1433
    %v1435 = vpop.f32.mrf.mxu0
    %v1436 = vpop.f32.mrf.mxu0
    %v1437 = vadd.f32 %v1237, %v1436
    %v1438 = vpop.f32.mrf.mxu0
    %1439 = vmatprep.mubr.bf16.mxu0 0
    %1440 = vmatmul.mubr.bf16.gmra.mxu0 %v1213
    %v1441 = vpop.f32.mrf.mxu0
    %v1442 = vadd.f32 %v1237, %v1441
    %v1443 = vpop.f32.mrf.mxu0
    %v1444 = vpop.f32.mrf.mxu0
    %v1445 = vadd.f32 %v1237, %v1444
    %v1446 = vpop.f32.mrf.mxu0
    %1447 = vdwg.mxu0
    %v1448 = vmax.f32 %v1322, 0.0
    %v1449 = vmax.f32 %v1325, 0.0
    %v1450 = vmax.f32 %v1330, 0.0
    %v1451 = vmax.f32 %v1333, 0.0
    %v1452 = vmax.f32 %v1338, 0.0
    %v1453 = vmax.f32 %v1341, 0.0
    %v1454 = vmax.f32 %v1346, 0.0
    %v1455 = vmax.f32 %v1349, 0.0
    %v1456 = vmax.f32 %v1354, 0.0
    %v1457 = vmax.f32 %v1357, 0.0
    %v1458 = vmax.f32 %v1362, 0.0
    %v1459 = vmax.f32 %v1365, 0.0
    %v1460 = vmax.f32 %v1370, 0.0
    %v1461 = vmax.f32 %v1373, 0.0
    %v1462 = vmax.f32 %v1378, 0.0
    %v1463 = vmax.f32 %v1381, 0.0
    %v1464 = vmax.f32 %v1386, 0.0
    %v1465 = vmax.f32 %v1389, 0.0
    %v1466 = vmax.f32 %v1394, 0.0
    %v1467 = vmax.f32 %v1397, 0.0
    %v1468 = vmax.f32 %v1402, 0.0
    %v1469 = vmax.f32 %v1405, 0.0
    %v1470 = vmax.f32 %v1410, 0.0
    %v1471 = vmax.f32 %v1413, 0.0
    %v1472 = vmax.f32 %v1418, 0.0
    %v1473 = vmax.f32 %v1421, 0.0
    %v1474 = vmax.f32 %v1426, 0.0
    %v1475 = vmax.f32 %v1429, 0.0
    %v1476 = vmax.f32 %v1434, 0.0
    %v1477 = vmax.f32 %v1437, 0.0
    %v1478 = vmax.f32 %v1442, 0.0
    %v1479 = vmax.f32 %v1445, 0.0
    %v1480 = vpack.c.bf16 %v1449, %v1448
    %v1481 = vpack.c.bf16 %v1451, %v1450
    %v1482 = vpack.c.bf16 %v1453, %v1452
    %v1483 = vpack.c.bf16 %v1455, %v1454
    %v1484 = vpack.c.bf16 %v1457, %v1456
    %v1485 = vpack.c.bf16 %v1459, %v1458
    %v1486 = vpack.c.bf16 %v1461, %v1460
    %v1487 = vpack.c.bf16 %v1463, %v1462
    %v1488 = vpack.c.bf16 %v1465, %v1464
    %v1489 = vpack.c.bf16 %v1467, %v1466
    %v1490 = vpack.c.bf16 %v1469, %v1468
    %v1491 = vpack.c.bf16 %v1471, %v1470
    %v1492 = vpack.c.bf16 %v1473, %v1472
    %v1493 = vpack.c.bf16 %v1475, %v1474
    %v1494 = vpack.c.bf16 %v1477, %v1476
    %v1495 = vpack.c.bf16 %v1479, %v1478
    %s1496 = scalar_lea.vmem [#allocation2], 256
    %v1497 = vld [vmem:[%s1496] sm:$0xf]
    %v1498 = vld [vmem:[%s1496 + $0x4] sm:$0xf]
    %v1499 = vld [vmem:[%s1496 + $0x8] sm:$0xf]
    %v1500 = vld [vmem:[%s1496 + $0xc] sm:$0xf]
    %v1501 = vld [vmem:[%s1496 + $0x10] sm:$0xf]
    %v1502 = vld [vmem:[%s1496 + $0x14] sm:$0xf]
    %v1503 = vld [vmem:[%s1496 + $0x18] sm:$0xf]
    %v1504 = vld [vmem:[%s1496 + $0x1c] sm:$0xf]
    %v1505 = vld [vmem:[%s1496 + $0x20] sm:$0xf]
    %v1506 = vld [vmem:[%s1496 + $0x24] sm:$0xf]
    %v1507 = vld [vmem:[%s1496 + $0x28] sm:$0xf]
    %v1508 = vld [vmem:[%s1496 + $0x2c] sm:$0xf]
    %v1509 = vld [vmem:[%s1496 + $0x30] sm:$0xf]
    %v1510 = vld [vmem:[%s1496 + $0x34] sm:$0xf]
    %v1511 = vld [vmem:[%s1496 + $0x38] sm:$0xf]
    %v1512 = vld [vmem:[%s1496 + $0x3c] sm:$0xf]
    %s1513 = scalar_lea.vmem %s4, 4
    %v1514 = vld [vmem:[%s1513] sm:$0x1]
    %v1516 = vlaneseq
    %v1517 = vshrl.u32 %v1516, 7
    %v1518 = vsub.s32 0, %v1517
    %v1519 = vrot.slane %v1514, %v1518
    %v1537 = vunpack.c.l.b16 %v1497
    %v1538 = vunpack.c.l.b16 %v1498
    %v1539 = vunpack.c.l.b16 %v1499
    %v1540 = vunpack.c.l.b16 %v1500
    %v1541 = vunpack.c.l.b16 %v1501
    %v1542 = vunpack.c.l.b16 %v1502
    %v1543 = vunpack.c.l.b16 %v1503
    %v1544 = vunpack.c.l.b16 %v1504
    %v1545 = vunpack.c.l.b16 %v1505
    %v1546 = vunpack.c.l.b16 %v1506
    %v1547 = vunpack.c.l.b16 %v1507
    %v1548 = vunpack.c.l.b16 %v1508
    %v1549 = vunpack.c.l.b16 %v1509
    %v1550 = vunpack.c.l.b16 %v1510
    %v1551 = vunpack.c.l.b16 %v1511
    %v1552 = vunpack.c.l.b16 %v1512
    %v1553 = vpack.c.b16 %v1538, %v1537
    %v1554 = vpack.c.b16 %v1540, %v1539
    %v1555 = vpack.c.b16 %v1542, %v1541
    %v1556 = vpack.c.b16 %v1544, %v1543
    %v1557 = vpack.c.b16 %v1546, %v1545
    %v1558 = vpack.c.b16 %v1548, %v1547
    %v1559 = vpack.c.b16 %v1550, %v1549
    %v1560 = vpack.c.b16 %v1552, %v1551
    %1569 = vmatprep.subr.bf16.mxu0 0
    %1570 = vmatpush1.bf16.msra.mxu0 %v1560
    %1571 = vmatprep.subr.bf16.mxu0 0
    %1572 = vmatpush1.bf16.msra.mxu0 %v1559
    %1573 = vmatprep.subr.bf16.mxu0 0
    %1574 = vmatpush1.bf16.msra.mxu0 %v1558
    %1575 = vmatprep.subr.bf16.mxu0 0
    %1576 = vmatpush1.bf16.msra.mxu0 %v1557
    %1577 = vmatprep.subr.bf16.mxu0 0
    %1578 = vmatpush1.bf16.msra.mxu0 %v1556
    %1579 = vmatprep.subr.bf16.mxu0 0
    %1580 = vmatpush1.bf16.msra.mxu0 %v1555
    %1581 = vmatprep.subr.bf16.mxu0 0
    %1582 = vmatpush1.bf16.msra.mxu0 %v1554
    %1583 = vmatprep.subr.bf16.mxu0 0
    %1584 = vmatpush1.bf16.msra.mxu0 %v1553
    %1585 = vmatprep.subr.bf16.mxu0 0
    %1586 = vmatpush2.bf16.msra.mxu0 0
    %1587 = vmatprep.subr.bf16.mxu0 0
    %1588 = vmatpush2.bf16.msra.mxu0 0
    %1589 = vmatprep.subr.bf16.mxu0 0
    %1590 = vmatpush2.bf16.msra.mxu0 0
    %1591 = vmatprep.subr.bf16.mxu0 0
    %1592 = vmatpush2.bf16.msra.mxu0 0
    %1593 = vmatprep.subr.bf16.mxu0 0
    %1594 = vmatpush2.bf16.msra.mxu0 0
    %1595 = vmatprep.subr.bf16.mxu0 0
    %1596 = vmatpush2.bf16.msra.mxu0 0
    %1597 = vmatprep.subr.bf16.mxu0 0
    %1598 = vmatpush2.bf16.msra.mxu0 0
    %1599 = vmatprep.subr.bf16.mxu0 0
    %1600 = vmatpush2.bf16.msra.mxu0 0
    %1601 = vmatprep.mubr.bf16.mxu0 0
    %1602 = vmatmul.mubr.bf16.gmra.mxu0 %v1480
    %v1603 = vpop.f32.mrf.mxu0
    %v1604 = vadd.f32 %v1519, %v1603
    %v1605 = vpop.f32.mrf.mxu0
    %v1606 = vpop.f32.mrf.mxu0
    %v1607 = vadd.f32 %v1519, %v1606
    %v1608 = vpop.f32.mrf.mxu0
    %1609 = vmatprep.mubr.bf16.mxu0 0
    %1610 = vmatmul.mubr.bf16.gmra.mxu0 %v1481
    %v1611 = vpop.f32.mrf.mxu0
    %v1612 = vadd.f32 %v1519, %v1611
    %v1613 = vpop.f32.mrf.mxu0
    %v1614 = vpop.f32.mrf.mxu0
    %v1615 = vadd.f32 %v1519, %v1614
    %v1616 = vpop.f32.mrf.mxu0
    %1617 = vmatprep.mubr.bf16.mxu0 0
    %1618 = vmatmul.mubr.bf16.gmra.mxu0 %v1482
    %v1619 = vpop.f32.mrf.mxu0
    %v1620 = vadd.f32 %v1519, %v1619
    %v1621 = vpop.f32.mrf.mxu0
    %v1622 = vpop.f32.mrf.mxu0
    %v1623 = vadd.f32 %v1519, %v1622
    %v1624 = vpop.f32.mrf.mxu0
    %1625 = vmatprep.mubr.bf16.mxu0 0
    %1626 = vmatmul.mubr.bf16.gmra.mxu0 %v1483
    %v1627 = vpop.f32.mrf.mxu0
    %v1628 = vadd.f32 %v1519, %v1627
    %v1629 = vpop.f32.mrf.mxu0
    %v1630 = vpop.f32.mrf.mxu0
    %v1631 = vadd.f32 %v1519, %v1630
    %v1632 = vpop.f32.mrf.mxu0
    %1633 = vmatprep.mubr.bf16.mxu0 0
    %1634 = vmatmul.mubr.bf16.gmra.mxu0 %v1484
    %v1635 = vpop.f32.mrf.mxu0
    %v1636 = vadd.f32 %v1519, %v1635
    %v1637 = vpop.f32.mrf.mxu0
    %v1638 = vpop.f32.mrf.mxu0
    %v1639 = vadd.f32 %v1519, %v1638
    %v1640 = vpop.f32.mrf.mxu0
    %1641 = vmatprep.mubr.bf16.mxu0 0
    %1642 = vmatmul.mubr.bf16.gmra.mxu0 %v1485
    %v1643 = vpop.f32.mrf.mxu0
    %v1644 = vadd.f32 %v1519, %v1643
    %v1645 = vpop.f32.mrf.mxu0
    %v1646 = vpop.f32.mrf.mxu0
    %v1647 = vadd.f32 %v1519, %v1646
    %v1648 = vpop.f32.mrf.mxu0
    %1649 = vmatprep.mubr.bf16.mxu0 0
    %1650 = vmatmul.mubr.bf16.gmra.mxu0 %v1486
    %v1651 = vpop.f32.mrf.mxu0
    %v1652 = vadd.f32 %v1519, %v1651
    %v1653 = vpop.f32.mrf.mxu0
    %v1654 = vpop.f32.mrf.mxu0
    %v1655 = vadd.f32 %v1519, %v1654
    %v1656 = vpop.f32.mrf.mxu0
    %1657 = vmatprep.mubr.bf16.mxu0 0
    %1658 = vmatmul.mubr.bf16.gmra.mxu0 %v1487
    %v1659 = vpop.f32.mrf.mxu0
    %v1660 = vadd.f32 %v1519, %v1659
    %v1661 = vpop.f32.mrf.mxu0
    %v1662 = vpop.f32.mrf.mxu0
    %v1663 = vadd.f32 %v1519, %v1662
    %v1664 = vpop.f32.mrf.mxu0
    %1665 = vmatprep.mubr.bf16.mxu0 0
    %1666 = vmatmul.mubr.bf16.gmra.mxu0 %v1488
    %v1667 = vpop.f32.mrf.mxu0
    %v1668 = vadd.f32 %v1519, %v1667
    %v1669 = vpop.f32.mrf.mxu0
    %v1670 = vpop.f32.mrf.mxu0
    %v1671 = vadd.f32 %v1519, %v1670
    %v1672 = vpop.f32.mrf.mxu0
    %1673 = vmatprep.mubr.bf16.mxu0 0
    %1674 = vmatmul.mubr.bf16.gmra.mxu0 %v1489
    %v1675 = vpop.f32.mrf.mxu0
    %v1676 = vadd.f32 %v1519, %v1675
    %v1677 = vpop.f32.mrf.mxu0
    %v1678 = vpop.f32.mrf.mxu0
    %v1679 = vadd.f32 %v1519, %v1678
    %v1680 = vpop.f32.mrf.mxu0
    %1681 = vmatprep.mubr.bf16.mxu0 0
    %1682 = vmatmul.mubr.bf16.gmra.mxu0 %v1490
    %v1683 = vpop.f32.mrf.mxu0
    %v1684 = vadd.f32 %v1519, %v1683
    %v1685 = vpop.f32.mrf.mxu0
    %v1686 = vpop.f32.mrf.mxu0
    %v1687 = vadd.f32 %v1519, %v1686
    %v1688 = vpop.f32.mrf.mxu0
    %1689 = vmatprep.mubr.bf16.mxu0 0
    %1690 = vmatmul.mubr.bf16.gmra.mxu0 %v1491
    %v1691 = vpop.f32.mrf.mxu0
    %v1692 = vadd.f32 %v1519, %v1691
    %v1693 = vpop.f32.mrf.mxu0
    %v1694 = vpop.f32.mrf.mxu0
    %v1695 = vadd.f32 %v1519, %v1694
    %v1696 = vpop.f32.mrf.mxu0
    %1697 = vmatprep.mubr.bf16.mxu0 0
    %1698 = vmatmul.mubr.bf16.gmra.mxu0 %v1492
    %v1699 = vpop.f32.mrf.mxu0
    %v1700 = vadd.f32 %v1519, %v1699
    %v1701 = vpop.f32.mrf.mxu0
    %v1702 = vpop.f32.mrf.mxu0
    %v1703 = vadd.f32 %v1519, %v1702
    %v1704 = vpop.f32.mrf.mxu0
    %1705 = vmatprep.mubr.bf16.mxu0 0
    %1706 = vmatmul.mubr.bf16.gmra.mxu0 %v1493
    %v1707 = vpop.f32.mrf.mxu0
    %v1708 = vadd.f32 %v1519, %v1707
    %v1709 = vpop.f32.mrf.mxu0
    %v1710 = vpop.f32.mrf.mxu0
    %v1711 = vadd.f32 %v1519, %v1710
    %v1712 = vpop.f32.mrf.mxu0
    %1713 = vmatprep.mubr.bf16.mxu0 0
    %1714 = vmatmul.mubr.bf16.gmra.mxu0 %v1494
    %v1715 = vpop.f32.mrf.mxu0
    %v1716 = vadd.f32 %v1519, %v1715
    %v1717 = vpop.f32.mrf.mxu0
    %v1718 = vpop.f32.mrf.mxu0
    %v1719 = vadd.f32 %v1519, %v1718
    %v1720 = vpop.f32.mrf.mxu0
    %1721 = vmatprep.mubr.bf16.mxu0 0
    %1722 = vmatmul.mubr.bf16.gmra.mxu0 %v1495
    %v1723 = vpop.f32.mrf.mxu0
    %v1724 = vadd.f32 %v1519, %v1723
    %v1725 = vpop.f32.mrf.mxu0
    %v1726 = vpop.f32.mrf.mxu0
    %v1727 = vadd.f32 %v1519, %v1726
    %v1728 = vpop.f32.mrf.mxu0
    %1729 = vdwg.mxu0
    %v1730 = vmax.f32 %v1604, 0.0
    %v1731 = vmax.f32 %v1607, 0.0
    %v1732 = vmax.f32 %v1612, 0.0
    %v1733 = vmax.f32 %v1615, 0.0
    %v1734 = vmax.f32 %v1620, 0.0
    %v1735 = vmax.f32 %v1623, 0.0
    %v1736 = vmax.f32 %v1628, 0.0
    %v1737 = vmax.f32 %v1631, 0.0
    %v1738 = vmax.f32 %v1636, 0.0
    %v1739 = vmax.f32 %v1639, 0.0
    %v1740 = vmax.f32 %v1644, 0.0
    %v1741 = vmax.f32 %v1647, 0.0
    %v1742 = vmax.f32 %v1652, 0.0
    %v1743 = vmax.f32 %v1655, 0.0
    %v1744 = vmax.f32 %v1660, 0.0
    %v1745 = vmax.f32 %v1663, 0.0
    %v1746 = vmax.f32 %v1668, 0.0
    %v1747 = vmax.f32 %v1671, 0.0
    %v1748 = vmax.f32 %v1676, 0.0
    %v1749 = vmax.f32 %v1679, 0.0
    %v1750 = vmax.f32 %v1684, 0.0
    %v1751 = vmax.f32 %v1687, 0.0
    %v1752 = vmax.f32 %v1692, 0.0
    %v1753 = vmax.f32 %v1695, 0.0
    %v1754 = vmax.f32 %v1700, 0.0
    %v1755 = vmax.f32 %v1703, 0.0
    %v1756 = vmax.f32 %v1708, 0.0
    %v1757 = vmax.f32 %v1711, 0.0
    %v1758 = vmax.f32 %v1716, 0.0
    %v1759 = vmax.f32 %v1719, 0.0
    %v1760 = vmax.f32 %v1724, 0.0
    %v1761 = vmax.f32 %v1727, 0.0
    %v1762 = vpack.c.bf16 %v1731, %v1730
    %v1763 = vpack.c.bf16 %v1733, %v1732
    %v1764 = vpack.c.bf16 %v1735, %v1734
    %v1765 = vpack.c.bf16 %v1737, %v1736
    %v1766 = vpack.c.bf16 %v1739, %v1738
    %v1767 = vpack.c.bf16 %v1741, %v1740
    %v1768 = vpack.c.bf16 %v1743, %v1742
    %v1769 = vpack.c.bf16 %v1745, %v1744
    %v1770 = vpack.c.bf16 %v1747, %v1746
    %v1771 = vpack.c.bf16 %v1749, %v1748
    %v1772 = vpack.c.bf16 %v1751, %v1750
    %v1773 = vpack.c.bf16 %v1753, %v1752
    %v1774 = vpack.c.bf16 %v1755, %v1754
    %v1775 = vpack.c.bf16 %v1757, %v1756
    %v1776 = vpack.c.bf16 %v1759, %v1758
    %v1777 = vpack.c.bf16 %v1761, %v1760
    %s1778 = scalar_lea.vmem [#allocation2], 320
    %v1779 = vld [vmem:[%s1778] sm:$0xf]
    %v1780 = vld [vmem:[%s1778 + $0x4] sm:$0xf]
    %v1781 = vld [vmem:[%s1778 + $0x8] sm:$0xf]
    %v1782 = vld [vmem:[%s1778 + $0xc] sm:$0xf]
    %v1783 = vld [vmem:[%s1778 + $0x10] sm:$0xf]
    %v1784 = vld [vmem:[%s1778 + $0x14] sm:$0xf]
    %v1785 = vld [vmem:[%s1778 + $0x18] sm:$0xf]
    %v1786 = vld [vmem:[%s1778 + $0x1c] sm:$0xf]
    %v1787 = vld [vmem:[%s1778 + $0x20] sm:$0xf]
    %v1788 = vld [vmem:[%s1778 + $0x24] sm:$0xf]
    %v1789 = vld [vmem:[%s1778 + $0x28] sm:$0xf]
    %v1790 = vld [vmem:[%s1778 + $0x2c] sm:$0xf]
    %v1791 = vld [vmem:[%s1778 + $0x30] sm:$0xf]
    %v1792 = vld [vmem:[%s1778 + $0x34] sm:$0xf]
    %v1793 = vld [vmem:[%s1778 + $0x38] sm:$0xf]
    %v1794 = vld [vmem:[%s1778 + $0x3c] sm:$0xf]
    %s1795 = scalar_lea.vmem %s4, 5
    %v1796 = vld [vmem:[%s1795] sm:$0x1]
    %v1798 = vlaneseq
    %v1799 = vshrl.u32 %v1798, 7
    %v1800 = vsub.s32 0, %v1799
    %v1801 = vrot.slane %v1796, %v1800
    %v1819 = vunpack.c.l.b16 %v1779
    %v1820 = vunpack.c.l.b16 %v1780
    %v1821 = vunpack.c.l.b16 %v1781
    %v1822 = vunpack.c.l.b16 %v1782
    %v1823 = vunpack.c.l.b16 %v1783
    %v1824 = vunpack.c.l.b16 %v1784
    %v1825 = vunpack.c.l.b16 %v1785
    %v1826 = vunpack.c.l.b16 %v1786
    %v1827 = vunpack.c.l.b16 %v1787
    %v1828 = vunpack.c.l.b16 %v1788
    %v1829 = vunpack.c.l.b16 %v1789
    %v1830 = vunpack.c.l.b16 %v1790
    %v1831 = vunpack.c.l.b16 %v1791
    %v1832 = vunpack.c.l.b16 %v1792
    %v1833 = vunpack.c.l.b16 %v1793
    %v1834 = vunpack.c.l.b16 %v1794
    %v1835 = vpack.c.b16 %v1820, %v1819
    %v1836 = vpack.c.b16 %v1822, %v1821
    %v1837 = vpack.c.b16 %v1824, %v1823
    %v1838 = vpack.c.b16 %v1826, %v1825
    %v1839 = vpack.c.b16 %v1828, %v1827
    %v1840 = vpack.c.b16 %v1830, %v1829
    %v1841 = vpack.c.b16 %v1832, %v1831
    %v1842 = vpack.c.b16 %v1834, %v1833
    %1851 = vmatprep.subr.bf16.mxu0 0
    %1852 = vmatpush1.bf16.msra.mxu0 %v1842
    %1853 = vmatprep.subr.bf16.mxu0 0
    %1854 = vmatpush1.bf16.msra.mxu0 %v1841
    %1855 = vmatprep.subr.bf16.mxu0 0
    %1856 = vmatpush1.bf16.msra.mxu0 %v1840
    %1857 = vmatprep.subr.bf16.mxu0 0
    %1858 = vmatpush1.bf16.msra.mxu0 %v1839
    %1859 = vmatprep.subr.bf16.mxu0 0
    %1860 = vmatpush1.bf16.msra.mxu0 %v1838
    %1861 = vmatprep.subr.bf16.mxu0 0
    %1862 = vmatpush1.bf16.msra.mxu0 %v1837
    %1863 = vmatprep.subr.bf16.mxu0 0
    %1864 = vmatpush1.bf16.msra.mxu0 %v1836
    %1865 = vmatprep.subr.bf16.mxu0 0
    %1866 = vmatpush1.bf16.msra.mxu0 %v1835
    %1867 = vmatprep.subr.bf16.mxu0 0
    %1868 = vmatpush2.bf16.msra.mxu0 0
    %1869 = vmatprep.subr.bf16.mxu0 0
    %1870 = vmatpush2.bf16.msra.mxu0 0
    %1871 = vmatprep.subr.bf16.mxu0 0
    %1872 = vmatpush2.bf16.msra.mxu0 0
    %1873 = vmatprep.subr.bf16.mxu0 0
    %1874 = vmatpush2.bf16.msra.mxu0 0
    %1875 = vmatprep.subr.bf16.mxu0 0
    %1876 = vmatpush2.bf16.msra.mxu0 0
    %1877 = vmatprep.subr.bf16.mxu0 0
    %1878 = vmatpush2.bf16.msra.mxu0 0
    %1879 = vmatprep.subr.bf16.mxu0 0
    %1880 = vmatpush2.bf16.msra.mxu0 0
    %1881 = vmatprep.subr.bf16.mxu0 0
    %1882 = vmatpush2.bf16.msra.mxu0 0
    %1883 = vmatprep.mubr.bf16.mxu0 0
    %1884 = vmatmul.mubr.bf16.gmra.mxu0 %v1762
    %v1885 = vpop.f32.mrf.mxu0
    %v1886 = vadd.f32 %v1801, %v1885
    %v1887 = vpop.f32.mrf.mxu0
    %v1888 = vpop.f32.mrf.mxu0
    %v1889 = vadd.f32 %v1801, %v1888
    %v1890 = vpop.f32.mrf.mxu0
    %1891 = vmatprep.mubr.bf16.mxu0 0
    %1892 = vmatmul.mubr.bf16.gmra.mxu0 %v1763
    %v1893 = vpop.f32.mrf.mxu0
    %v1894 = vadd.f32 %v1801, %v1893
    %v1895 = vpop.f32.mrf.mxu0
    %v1896 = vpop.f32.mrf.mxu0
    %v1897 = vadd.f32 %v1801, %v1896
    %v1898 = vpop.f32.mrf.mxu0
    %1899 = vmatprep.mubr.bf16.mxu0 0
    %1900 = vmatmul.mubr.bf16.gmra.mxu0 %v1764
    %v1901 = vpop.f32.mrf.mxu0
    %v1902 = vadd.f32 %v1801, %v1901
    %v1903 = vpop.f32.mrf.mxu0
    %v1904 = vpop.f32.mrf.mxu0
    %v1905 = vadd.f32 %v1801, %v1904
    %v1906 = vpop.f32.mrf.mxu0
    %1907 = vmatprep.mubr.bf16.mxu0 0
    %1908 = vmatmul.mubr.bf16.gmra.mxu0 %v1765
    %v1909 = vpop.f32.mrf.mxu0
    %v1910 = vadd.f32 %v1801, %v1909
    %v1911 = vpop.f32.mrf.mxu0
    %v1912 = vpop.f32.mrf.mxu0
    %v1913 = vadd.f32 %v1801, %v1912
    %v1914 = vpop.f32.mrf.mxu0
    %1915 = vmatprep.mubr.bf16.mxu0 0
    %1916 = vmatmul.mubr.bf16.gmra.mxu0 %v1766
    %v1917 = vpop.f32.mrf.mxu0
    %v1918 = vadd.f32 %v1801, %v1917
    %v1919 = vpop.f32.mrf.mxu0
    %v1920 = vpop.f32.mrf.mxu0
    %v1921 = vadd.f32 %v1801, %v1920
    %v1922 = vpop.f32.mrf.mxu0
    %1923 = vmatprep.mubr.bf16.mxu0 0
    %1924 = vmatmul.mubr.bf16.gmra.mxu0 %v1767
    %v1925 = vpop.f32.mrf.mxu0
    %v1926 = vadd.f32 %v1801, %v1925
    %v1927 = vpop.f32.mrf.mxu0
    %v1928 = vpop.f32.mrf.mxu0
    %v1929 = vadd.f32 %v1801, %v1928
    %v1930 = vpop.f32.mrf.mxu0
    %1931 = vmatprep.mubr.bf16.mxu0 0
    %1932 = vmatmul.mubr.bf16.gmra.mxu0 %v1768
    %v1933 = vpop.f32.mrf.mxu0
    %v1934 = vadd.f32 %v1801, %v1933
    %v1935 = vpop.f32.mrf.mxu0
    %v1936 = vpop.f32.mrf.mxu0
    %v1937 = vadd.f32 %v1801, %v1936
    %v1938 = vpop.f32.mrf.mxu0
    %1939 = vmatprep.mubr.bf16.mxu0 0
    %1940 = vmatmul.mubr.bf16.gmra.mxu0 %v1769
    %v1941 = vpop.f32.mrf.mxu0
    %v1942 = vadd.f32 %v1801, %v1941
    %v1943 = vpop.f32.mrf.mxu0
    %v1944 = vpop.f32.mrf.mxu0
    %v1945 = vadd.f32 %v1801, %v1944
    %v1946 = vpop.f32.mrf.mxu0
    %1947 = vmatprep.mubr.bf16.mxu0 0
    %1948 = vmatmul.mubr.bf16.gmra.mxu0 %v1770
    %v1949 = vpop.f32.mrf.mxu0
    %v1950 = vadd.f32 %v1801, %v1949
    %v1951 = vpop.f32.mrf.mxu0
    %v1952 = vpop.f32.mrf.mxu0
    %v1953 = vadd.f32 %v1801, %v1952
    %v1954 = vpop.f32.mrf.mxu0
    %1955 = vmatprep.mubr.bf16.mxu0 0
    %1956 = vmatmul.mubr.bf16.gmra.mxu0 %v1771
    %v1957 = vpop.f32.mrf.mxu0
    %v1958 = vadd.f32 %v1801, %v1957
    %v1959 = vpop.f32.mrf.mxu0
    %v1960 = vpop.f32.mrf.mxu0
    %v1961 = vadd.f32 %v1801, %v1960
    %v1962 = vpop.f32.mrf.mxu0
    %1963 = vmatprep.mubr.bf16.mxu0 0
    %1964 = vmatmul.mubr.bf16.gmra.mxu0 %v1772
    %v1965 = vpop.f32.mrf.mxu0
    %v1966 = vadd.f32 %v1801, %v1965
    %v1967 = vpop.f32.mrf.mxu0
    %v1968 = vpop.f32.mrf.mxu0
    %v1969 = vadd.f32 %v1801, %v1968
    %v1970 = vpop.f32.mrf.mxu0
    %1971 = vmatprep.mubr.bf16.mxu0 0
    %1972 = vmatmul.mubr.bf16.gmra.mxu0 %v1773
    %v1973 = vpop.f32.mrf.mxu0
    %v1974 = vadd.f32 %v1801, %v1973
    %v1975 = vpop.f32.mrf.mxu0
    %v1976 = vpop.f32.mrf.mxu0
    %v1977 = vadd.f32 %v1801, %v1976
    %v1978 = vpop.f32.mrf.mxu0
    %1979 = vmatprep.mubr.bf16.mxu0 0
    %1980 = vmatmul.mubr.bf16.gmra.mxu0 %v1774
    %v1981 = vpop.f32.mrf.mxu0
    %v1982 = vadd.f32 %v1801, %v1981
    %v1983 = vpop.f32.mrf.mxu0
    %v1984 = vpop.f32.mrf.mxu0
    %v1985 = vadd.f32 %v1801, %v1984
    %v1986 = vpop.f32.mrf.mxu0
    %1987 = vmatprep.mubr.bf16.mxu0 0
    %1988 = vmatmul.mubr.bf16.gmra.mxu0 %v1775
    %v1989 = vpop.f32.mrf.mxu0
    %v1990 = vadd.f32 %v1801, %v1989
    %v1991 = vpop.f32.mrf.mxu0
    %v1992 = vpop.f32.mrf.mxu0
    %v1993 = vadd.f32 %v1801, %v1992
    %v1994 = vpop.f32.mrf.mxu0
    %1995 = vmatprep.mubr.bf16.mxu0 0
    %1996 = vmatmul.mubr.bf16.gmra.mxu0 %v1776
    %v1997 = vpop.f32.mrf.mxu0
    %v1998 = vadd.f32 %v1801, %v1997
    %v1999 = vpop.f32.mrf.mxu0
    %v2000 = vpop.f32.mrf.mxu0
    %v2001 = vadd.f32 %v1801, %v2000
    %v2002 = vpop.f32.mrf.mxu0
    %2003 = vmatprep.mubr.bf16.mxu0 0
    %2004 = vmatmul.mubr.bf16.gmra.mxu0 %v1777
    %v2005 = vpop.f32.mrf.mxu0
    %v2006 = vadd.f32 %v1801, %v2005
    %v2007 = vpop.f32.mrf.mxu0
    %v2008 = vpop.f32.mrf.mxu0
    %v2009 = vadd.f32 %v1801, %v2008
    %v2010 = vpop.f32.mrf.mxu0
    %2011 = vdwg.mxu0
    %v2012 = vmax.f32 %v1886, 0.0
    %v2013 = vmax.f32 %v1889, 0.0
    %v2014 = vmax.f32 %v1894, 0.0
    %v2015 = vmax.f32 %v1897, 0.0
    %v2016 = vmax.f32 %v1902, 0.0
    %v2017 = vmax.f32 %v1905, 0.0
    %v2018 = vmax.f32 %v1910, 0.0
    %v2019 = vmax.f32 %v1913, 0.0
    %v2020 = vmax.f32 %v1918, 0.0
    %v2021 = vmax.f32 %v1921, 0.0
    %v2022 = vmax.f32 %v1926, 0.0
    %v2023 = vmax.f32 %v1929, 0.0
    %v2024 = vmax.f32 %v1934, 0.0
    %v2025 = vmax.f32 %v1937, 0.0
    %v2026 = vmax.f32 %v1942, 0.0
    %v2027 = vmax.f32 %v1945, 0.0
    %v2028 = vmax.f32 %v1950, 0.0
    %v2029 = vmax.f32 %v1953, 0.0
    %v2030 = vmax.f32 %v1958, 0.0
    %v2031 = vmax.f32 %v1961, 0.0
    %v2032 = vmax.f32 %v1966, 0.0
    %v2033 = vmax.f32 %v1969, 0.0
    %v2034 = vmax.f32 %v1974, 0.0
    %v2035 = vmax.f32 %v1977, 0.0
    %v2036 = vmax.f32 %v1982, 0.0
    %v2037 = vmax.f32 %v1985, 0.0
    %v2038 = vmax.f32 %v1990, 0.0
    %v2039 = vmax.f32 %v1993, 0.0
    %v2040 = vmax.f32 %v1998, 0.0
    %v2041 = vmax.f32 %v2001, 0.0
    %v2042 = vmax.f32 %v2006, 0.0
    %v2043 = vmax.f32 %v2009, 0.0
    %v2044 = vpack.c.bf16 %v2013, %v2012
    %v2045 = vpack.c.bf16 %v2015, %v2014
    %v2046 = vpack.c.bf16 %v2017, %v2016
    %v2047 = vpack.c.bf16 %v2019, %v2018
    %v2048 = vpack.c.bf16 %v2021, %v2020
    %v2049 = vpack.c.bf16 %v2023, %v2022
    %v2050 = vpack.c.bf16 %v2025, %v2024
    %v2051 = vpack.c.bf16 %v2027, %v2026
    %v2052 = vpack.c.bf16 %v2029, %v2028
    %v2053 = vpack.c.bf16 %v2031, %v2030
    %v2054 = vpack.c.bf16 %v2033, %v2032
    %v2055 = vpack.c.bf16 %v2035, %v2034
    %v2056 = vpack.c.bf16 %v2037, %v2036
    %v2057 = vpack.c.bf16 %v2039, %v2038
    %v2058 = vpack.c.bf16 %v2041, %v2040
    %v2059 = vpack.c.bf16 %v2043, %v2042
    %v2060 = vld [vmem:[%s5] sm:$0xf]
    %v2061 = vld [vmem:[%s5 + $0x4] sm:$0xf]
    %v2062 = vld [vmem:[%s5 + $0x8] sm:$0xf]
    %v2063 = vld [vmem:[%s5 + $0xc] sm:$0xf]
    %v2064 = vld [vmem:[%s5 + $0x10] sm:$0xf]
    %v2065 = vld [vmem:[%s5 + $0x14] sm:$0xf]
    %v2066 = vld [vmem:[%s5 + $0x18] sm:$0xf]
    %v2067 = vld [vmem:[%s5 + $0x1c] sm:$0xf]
    %v2068 = vld [vmem:[%s5 + $0x20] sm:$0xf]
    %v2069 = vld [vmem:[%s5 + $0x24] sm:$0xf]
    %v2070 = vld [vmem:[%s5 + $0x28] sm:$0xf]
    %v2071 = vld [vmem:[%s5 + $0x2c] sm:$0xf]
    %v2072 = vld [vmem:[%s5 + $0x30] sm:$0xf]
    %v2073 = vld [vmem:[%s5 + $0x34] sm:$0xf]
    %v2074 = vld [vmem:[%s5 + $0x38] sm:$0xf]
    %v2075 = vld [vmem:[%s5 + $0x3c] sm:$0xf]
    %v2076 = vld [vmem:[%s6] sm:$0x1]
    %v2078 = vlaneseq
    %v2079 = vshrl.u32 %v2078, 7
    %v2080 = vsub.s32 0, %v2079
    %v2081 = vrot.slane %v2076, %v2080
    %v2099 = vunpack.c.l.b16 %v2060
    %v2100 = vunpack.c.l.b16 %v2061
    %v2101 = vunpack.c.l.b16 %v2062
    %v2102 = vunpack.c.l.b16 %v2063
    %v2103 = vunpack.c.l.b16 %v2064
    %v2104 = vunpack.c.l.b16 %v2065
    %v2105 = vunpack.c.l.b16 %v2066
    %v2106 = vunpack.c.l.b16 %v2067
    %v2107 = vunpack.c.l.b16 %v2068
    %v2108 = vunpack.c.l.b16 %v2069
    %v2109 = vunpack.c.l.b16 %v2070
    %v2110 = vunpack.c.l.b16 %v2071
    %v2111 = vunpack.c.l.b16 %v2072
    %v2112 = vunpack.c.l.b16 %v2073
    %v2113 = vunpack.c.l.b16 %v2074
    %v2114 = vunpack.c.l.b16 %v2075
    %v2115 = vpack.c.b16 %v2100, %v2099
    %v2116 = vpack.c.b16 %v2102, %v2101
    %v2117 = vpack.c.b16 %v2104, %v2103
    %v2118 = vpack.c.b16 %v2106, %v2105
    %v2119 = vpack.c.b16 %v2108, %v2107
    %v2120 = vpack.c.b16 %v2110, %v2109
    %v2121 = vpack.c.b16 %v2112, %v2111
    %v2122 = vpack.c.b16 %v2114, %v2113
    %2131 = vmatprep.subr.bf16.mxu0 0
    %2132 = vmatpush1.bf16.msra.mxu0 %v2122
    %2133 = vmatprep.subr.bf16.mxu0 0
    %2134 = vmatpush1.bf16.msra.mxu0 %v2121
    %2135 = vmatprep.subr.bf16.mxu0 0
    %2136 = vmatpush1.bf16.msra.mxu0 %v2120
    %2137 = vmatprep.subr.bf16.mxu0 0
    %2138 = vmatpush1.bf16.msra.mxu0 %v2119
    %2139 = vmatprep.subr.bf16.mxu0 0
    %2140 = vmatpush1.bf16.msra.mxu0 %v2118
    %2141 = vmatprep.subr.bf16.mxu0 0
    %2142 = vmatpush1.bf16.msra.mxu0 %v2117
    %2143 = vmatprep.subr.bf16.mxu0 0
    %2144 = vmatpush1.bf16.msra.mxu0 %v2116
    %2145 = vmatprep.subr.bf16.mxu0 0
    %2146 = vmatpush1.bf16.msra.mxu0 %v2115
    %2147 = vmatprep.subr.bf16.mxu0 0
    %2148 = vmatpush2.bf16.msra.mxu0 0
    %2149 = vmatprep.subr.bf16.mxu0 0
    %2150 = vmatpush2.bf16.msra.mxu0 0
    %2151 = vmatprep.subr.bf16.mxu0 0
    %2152 = vmatpush2.bf16.msra.mxu0 0
    %2153 = vmatprep.subr.bf16.mxu0 0
    %2154 = vmatpush2.bf16.msra.mxu0 0
    %2155 = vmatprep.subr.bf16.mxu0 0
    %2156 = vmatpush2.bf16.msra.mxu0 0
    %2157 = vmatprep.subr.bf16.mxu0 0
    %2158 = vmatpush2.bf16.msra.mxu0 0
    %2159 = vmatprep.subr.bf16.mxu0 0
    %2160 = vmatpush2.bf16.msra.mxu0 0
    %2161 = vmatprep.subr.bf16.mxu0 0
    %2162 = vmatpush2.bf16.msra.mxu0 0
    %2163 = vmatprep.mubr.bf16.mxu0 0
    %2164 = vmatmul.mubr.bf16.gmra.mxu0 %v2044
    %v2165 = vpop.f32.mrf.mxu0
    %v2166 = vadd.f32 %v2081, %v2165
    %v2167 = vpop.f32.mrf.mxu0
    %v2168 = vpop.f32.mrf.mxu0
    %v2169 = vadd.f32 %v2081, %v2168
    %v2170 = vpop.f32.mrf.mxu0
    %2171 = vmatprep.mubr.bf16.mxu0 0
    %2172 = vmatmul.mubr.bf16.gmra.mxu0 %v2045
    %v2173 = vpop.f32.mrf.mxu0
    %v2174 = vadd.f32 %v2081, %v2173
    %v2175 = vpop.f32.mrf.mxu0
    %v2176 = vpop.f32.mrf.mxu0
    %v2177 = vadd.f32 %v2081, %v2176
    %v2178 = vpop.f32.mrf.mxu0
    %2179 = vmatprep.mubr.bf16.mxu0 0
    %2180 = vmatmul.mubr.bf16.gmra.mxu0 %v2046
    %v2181 = vpop.f32.mrf.mxu0
    %v2182 = vadd.f32 %v2081, %v2181
    %v2183 = vpop.f32.mrf.mxu0
    %v2184 = vpop.f32.mrf.mxu0
    %v2185 = vadd.f32 %v2081, %v2184
    %v2186 = vpop.f32.mrf.mxu0
    %2187 = vmatprep.mubr.bf16.mxu0 0
    %2188 = vmatmul.mubr.bf16.gmra.mxu0 %v2047
    %v2189 = vpop.f32.mrf.mxu0
    %v2190 = vadd.f32 %v2081, %v2189
    %v2191 = vpop.f32.mrf.mxu0
    %v2192 = vpop.f32.mrf.mxu0
    %v2193 = vadd.f32 %v2081, %v2192
    %v2194 = vpop.f32.mrf.mxu0
    %2195 = vmatprep.mubr.bf16.mxu0 0
    %2196 = vmatmul.mubr.bf16.gmra.mxu0 %v2048
    %v2197 = vpop.f32.mrf.mxu0
    %v2198 = vadd.f32 %v2081, %v2197
    %v2199 = vpop.f32.mrf.mxu0
    %v2200 = vpop.f32.mrf.mxu0
    %v2201 = vadd.f32 %v2081, %v2200
    %v2202 = vpop.f32.mrf.mxu0
    %2203 = vmatprep.mubr.bf16.mxu0 0
    %2204 = vmatmul.mubr.bf16.gmra.mxu0 %v2049
    %v2205 = vpop.f32.mrf.mxu0
    %v2206 = vadd.f32 %v2081, %v2205
    %v2207 = vpop.f32.mrf.mxu0
    %v2208 = vpop.f32.mrf.mxu0
    %v2209 = vadd.f32 %v2081, %v2208
    %v2210 = vpop.f32.mrf.mxu0
    %2211 = vmatprep.mubr.bf16.mxu0 0
    %2212 = vmatmul.mubr.bf16.gmra.mxu0 %v2050
    %v2213 = vpop.f32.mrf.mxu0
    %v2214 = vadd.f32 %v2081, %v2213
    %v2215 = vpop.f32.mrf.mxu0
    %v2216 = vpop.f32.mrf.mxu0
    %v2217 = vadd.f32 %v2081, %v2216
    %v2218 = vpop.f32.mrf.mxu0
    %2219 = vmatprep.mubr.bf16.mxu0 0
    %2220 = vmatmul.mubr.bf16.gmra.mxu0 %v2051
    %v2221 = vpop.f32.mrf.mxu0
    %v2222 = vadd.f32 %v2081, %v2221
    %v2223 = vpop.f32.mrf.mxu0
    %v2224 = vpop.f32.mrf.mxu0
    %v2225 = vadd.f32 %v2081, %v2224
    %v2226 = vpop.f32.mrf.mxu0
    %2227 = vmatprep.mubr.bf16.mxu0 0
    %2228 = vmatmul.mubr.bf16.gmra.mxu0 %v2052
    %v2229 = vpop.f32.mrf.mxu0
    %v2230 = vadd.f32 %v2081, %v2229
    %v2231 = vpop.f32.mrf.mxu0
    %v2232 = vpop.f32.mrf.mxu0
    %v2233 = vadd.f32 %v2081, %v2232
    %v2234 = vpop.f32.mrf.mxu0
    %2235 = vmatprep.mubr.bf16.mxu0 0
    %2236 = vmatmul.mubr.bf16.gmra.mxu0 %v2053
    %v2237 = vpop.f32.mrf.mxu0
    %v2238 = vadd.f32 %v2081, %v2237
    %v2239 = vpop.f32.mrf.mxu0
    %v2240 = vpop.f32.mrf.mxu0
    %v2241 = vadd.f32 %v2081, %v2240
    %v2242 = vpop.f32.mrf.mxu0
    %2243 = vmatprep.mubr.bf16.mxu0 0
    %2244 = vmatmul.mubr.bf16.gmra.mxu0 %v2054
    %v2245 = vpop.f32.mrf.mxu0
    %v2246 = vadd.f32 %v2081, %v2245
    %v2247 = vpop.f32.mrf.mxu0
    %v2248 = vpop.f32.mrf.mxu0
    %v2249 = vadd.f32 %v2081, %v2248
    %v2250 = vpop.f32.mrf.mxu0
    %2251 = vmatprep.mubr.bf16.mxu0 0
    %2252 = vmatmul.mubr.bf16.gmra.mxu0 %v2055
    %v2253 = vpop.f32.mrf.mxu0
    %v2254 = vadd.f32 %v2081, %v2253
    %v2255 = vpop.f32.mrf.mxu0
    %v2256 = vpop.f32.mrf.mxu0
    %v2257 = vadd.f32 %v2081, %v2256
    %v2258 = vpop.f32.mrf.mxu0
    %2259 = vmatprep.mubr.bf16.mxu0 0
    %2260 = vmatmul.mubr.bf16.gmra.mxu0 %v2056
    %v2261 = vpop.f32.mrf.mxu0
    %v2262 = vadd.f32 %v2081, %v2261
    %v2263 = vpop.f32.mrf.mxu0
    %v2264 = vpop.f32.mrf.mxu0
    %v2265 = vadd.f32 %v2081, %v2264
    %v2266 = vpop.f32.mrf.mxu0
    %2267 = vmatprep.mubr.bf16.mxu0 0
    %2268 = vmatmul.mubr.bf16.gmra.mxu0 %v2057
    %v2269 = vpop.f32.mrf.mxu0
    %v2270 = vadd.f32 %v2081, %v2269
    %v2271 = vpop.f32.mrf.mxu0
    %v2272 = vpop.f32.mrf.mxu0
    %v2273 = vadd.f32 %v2081, %v2272
    %v2274 = vpop.f32.mrf.mxu0
    %2275 = vmatprep.mubr.bf16.mxu0 0
    %2276 = vmatmul.mubr.bf16.gmra.mxu0 %v2058
    %v2277 = vpop.f32.mrf.mxu0
    %v2278 = vadd.f32 %v2081, %v2277
    %v2279 = vpop.f32.mrf.mxu0
    %v2280 = vpop.f32.mrf.mxu0
    %v2281 = vadd.f32 %v2081, %v2280
    %v2282 = vpop.f32.mrf.mxu0
    %2283 = vmatprep.mubr.bf16.mxu0 0
    %2284 = vmatmul.mubr.bf16.gmra.mxu0 %v2059
    %v2285 = vpop.f32.mrf.mxu0
    %v2286 = vadd.f32 %v2081, %v2285
    %v2287 = vpop.f32.mrf.mxu0
    %v2288 = vpop.f32.mrf.mxu0
    %v2289 = vadd.f32 %v2081, %v2288
    %v2290 = vpop.f32.mrf.mxu0
    %2291 = vdwg.mxu0
    %2292 = vmax.xlane.f32.xlu0 %v2166
    %v2293 = vpop.xlane.xlu0 %2292
    %2294 = vmax.xlane.f32.xlu0 %v2169
    %v2295 = vpop.xlane.xlu0 %2294
    %2296 = vmax.xlane.f32.xlu0 %v2174
    %v2297 = vpop.xlane.xlu0 %2296
    %2298 = vmax.xlane.f32.xlu0 %v2177
    %v2299 = vpop.xlane.xlu0 %2298
    %2300 = vmax.xlane.f32.xlu0 %v2182
    %v2301 = vpop.xlane.xlu0 %2300
    %2302 = vmax.xlane.f32.xlu0 %v2185
    %v2303 = vpop.xlane.xlu0 %2302
    %2304 = vmax.xlane.f32.xlu0 %v2190
    %v2305 = vpop.xlane.xlu0 %2304
    %2306 = vmax.xlane.f32.xlu0 %v2193
    %v2307 = vpop.xlane.xlu0 %2306
    %2308 = vmax.xlane.f32.xlu0 %v2198
    %v2309 = vpop.xlane.xlu0 %2308
    %2310 = vmax.xlane.f32.xlu0 %v2201
    %v2311 = vpop.xlane.xlu0 %2310
    %2312 = vmax.xlane.f32.xlu0 %v2206
    %v2313 = vpop.xlane.xlu0 %2312
    %2314 = vmax.xlane.f32.xlu0 %v2209
    %v2315 = vpop.xlane.xlu0 %2314
    %2316 = vmax.xlane.f32.xlu0 %v2214
    %v2317 = vpop.xlane.xlu0 %2316
    %2318 = vmax.xlane.f32.xlu0 %v2217
    %v2319 = vpop.xlane.xlu0 %2318
    %2320 = vmax.xlane.f32.xlu0 %v2222
    %v2321 = vpop.xlane.xlu0 %2320
    %2322 = vmax.xlane.f32.xlu0 %v2225
    %v2323 = vpop.xlane.xlu0 %2322
    %2324 = vmax.xlane.f32.xlu0 %v2230
    %v2325 = vpop.xlane.xlu0 %2324
    %2326 = vmax.xlane.f32.xlu0 %v2233
    %v2327 = vpop.xlane.xlu0 %2326
    %2328 = vmax.xlane.f32.xlu0 %v2238
    %v2329 = vpop.xlane.xlu0 %2328
    %2330 = vmax.xlane.f32.xlu0 %v2241
    %v2331 = vpop.xlane.xlu0 %2330
    %2332 = vmax.xlane.f32.xlu0 %v2246
    %v2333 = vpop.xlane.xlu0 %2332
    %2334 = vmax.xlane.f32.xlu0 %v2249
    %v2335 = vpop.xlane.xlu0 %2334
    %2336 = vmax.xlane.f32.xlu0 %v2254
    %v2337 = vpop.xlane.xlu0 %2336
    %2338 = vmax.xlane.f32.xlu0 %v2257
    %v2339 = vpop.xlane.xlu0 %2338
    %2340 = vmax.xlane.f32.xlu0 %v2262
    %v2341 = vpop.xlane.xlu0 %2340
    %2342 = vmax.xlane.f32.xlu0 %v2265
    %v2343 = vpop.xlane.xlu0 %2342
    %2344 = vmax.xlane.f32.xlu0 %v2270
    %v2345 = vpop.xlane.xlu0 %2344
    %2346 = vmax.xlane.f32.xlu0 %v2273
    %v2347 = vpop.xlane.xlu0 %2346
    %2348 = vmax.xlane.f32.xlu0 %v2278
    %v2349 = vpop.xlane.xlu0 %2348
    %2350 = vmax.xlane.f32.xlu0 %v2281
    %v2351 = vpop.xlane.xlu0 %2350
    %2352 = vmax.xlane.f32.xlu0 %v2286
    %v2353 = vpop.xlane.xlu0 %2352
    %2354 = vmax.xlane.f32.xlu0 %v2289
    %v2355 = vpop.xlane.xlu0 %2354
    %v2356 = vsub.f32 %v2166, %v2293
    %v2357 = vsub.f32 %v2169, %v2295
    %v2358 = vsub.f32 %v2174, %v2297
    %v2359 = vsub.f32 %v2177, %v2299
    %v2360 = vsub.f32 %v2182, %v2301
    %v2361 = vsub.f32 %v2185, %v2303
    %v2362 = vsub.f32 %v2190, %v2305
    %v2363 = vsub.f32 %v2193, %v2307
    %v2364 = vsub.f32 %v2198, %v2309
    %v2365 = vsub.f32 %v2201, %v2311
    %v2366 = vsub.f32 %v2206, %v2313
    %v2367 = vsub.f32 %v2209, %v2315
    %v2368 = vsub.f32 %v2214, %v2317
    %v2369 = vsub.f32 %v2217, %v2319
    %v2370 = vsub.f32 %v2222, %v2321
    %v2371 = vsub.f32 %v2225, %v2323
    %v2372 = vsub.f32 %v2230, %v2325
    %v2373 = vsub.f32 %v2233, %v2327
    %v2374 = vsub.f32 %v2238, %v2329
    %v2375 = vsub.f32 %v2241, %v2331
    %v2376 = vsub.f32 %v2246, %v2333
    %v2377 = vsub.f32 %v2249, %v2335
    %v2378 = vsub.f32 %v2254, %v2337
    %v2379 = vsub.f32 %v2257, %v2339
    %v2380 = vsub.f32 %v2262, %v2341
    %v2381 = vsub.f32 %v2265, %v2343
    %v2382 = vsub.f32 %v2270, %v2345
    %v2383 = vsub.f32 %v2273, %v2347
    %v2384 = vsub.f32 %v2278, %v2349
    %v2385 = vsub.f32 %v2281, %v2351
    %v2386 = vsub.f32 %v2286, %v2353
    %v2387 = vsub.f32 %v2289, %v2355
    %v2388 = vmul.f32 %v2356, 1.442695
    %v2389 = vpow.pop %v2388
    %v2390 = vmul.f32 %v2357, 1.442695
    %v2391 = vpow.pop %v2390
    %v2392 = vmul.f32 %v2358, 1.442695
    %v2393 = vpow.pop %v2392
    %v2394 = vmul.f32 %v2359, 1.442695
    %v2395 = vpow.pop %v2394
    %v2396 = vmul.f32 %v2360, 1.442695
    %v2397 = vpow.pop %v2396
    %v2398 = vmul.f32 %v2361, 1.442695
    %v2399 = vpow.pop %v2398
    %v2400 = vmul.f32 %v2362, 1.442695
    %v2401 = vpow.pop %v2400
    %v2402 = vmul.f32 %v2363, 1.442695
    %v2403 = vpow.pop %v2402
    %v2404 = vmul.f32 %v2364, 1.442695
    %v2405 = vpow.pop %v2404
    %v2406 = vmul.f32 %v2365, 1.442695
    %v2407 = vpow.pop %v2406
    %v2408 = vmul.f32 %v2366, 1.442695
    %v2409 = vpow.pop %v2408
    %v2410 = vmul.f32 %v2367, 1.442695
    %v2411 = vpow.pop %v2410
    %v2412 = vmul.f32 %v2368, 1.442695
    %v2413 = vpow.pop %v2412
    %v2414 = vmul.f32 %v2369, 1.442695
    %v2415 = vpow.pop %v2414
    %v2416 = vmul.f32 %v2370, 1.442695
    %v2417 = vpow.pop %v2416
    %v2418 = vmul.f32 %v2371, 1.442695
    %v2419 = vpow.pop %v2418
    %v2420 = vmul.f32 %v2372, 1.442695
    %v2421 = vpow.pop %v2420
    %v2422 = vmul.f32 %v2373, 1.442695
    %v2423 = vpow.pop %v2422
    %v2424 = vmul.f32 %v2374, 1.442695
    %v2425 = vpow.pop %v2424
    %v2426 = vmul.f32 %v2375, 1.442695
    %v2427 = vpow.pop %v2426
    %v2428 = vmul.f32 %v2376, 1.442695
    %v2429 = vpow.pop %v2428
    %v2430 = vmul.f32 %v2377, 1.442695
    %v2431 = vpow.pop %v2430
    %v2432 = vmul.f32 %v2378, 1.442695
    %v2433 = vpow.pop %v2432
    %v2434 = vmul.f32 %v2379, 1.442695
    %v2435 = vpow.pop %v2434
    %v2436 = vmul.f32 %v2380, 1.442695
    %v2437 = vpow.pop %v2436
    %v2438 = vmul.f32 %v2381, 1.442695
    %v2439 = vpow.pop %v2438
    %v2440 = vmul.f32 %v2382, 1.442695
    %v2441 = vpow.pop %v2440
    %v2442 = vmul.f32 %v2383, 1.442695
    %v2443 = vpow.pop %v2442
    %v2444 = vmul.f32 %v2384, 1.442695
    %v2445 = vpow.pop %v2444
    %v2446 = vmul.f32 %v2385, 1.442695
    %v2447 = vpow.pop %v2446
    %v2448 = vmul.f32 %v2386, 1.442695
    %v2449 = vpow.pop %v2448
    %v2450 = vmul.f32 %v2387, 1.442695
    %v2451 = vpow.pop %v2450
    %2452 = vadd.xlane.f32.xlu0 %v2389
    %v2453 = vpop.xlane.xlu0 %2452
    %2454 = vadd.xlane.f32.xlu0 %v2391
    %v2455 = vpop.xlane.xlu0 %2454
    %2456 = vadd.xlane.f32.xlu0 %v2393
    %v2457 = vpop.xlane.xlu0 %2456
    %2458 = vadd.xlane.f32.xlu0 %v2395
    %v2459 = vpop.xlane.xlu0 %2458
    %2460 = vadd.xlane.f32.xlu0 %v2397
    %v2461 = vpop.xlane.xlu0 %2460
    %2462 = vadd.xlane.f32.xlu0 %v2399
    %v2463 = vpop.xlane.xlu0 %2462
    %2464 = vadd.xlane.f32.xlu0 %v2401
    %v2465 = vpop.xlane.xlu0 %2464
    %2466 = vadd.xlane.f32.xlu0 %v2403
    %v2467 = vpop.xlane.xlu0 %2466
    %2468 = vadd.xlane.f32.xlu0 %v2405
    %v2469 = vpop.xlane.xlu0 %2468
    %2470 = vadd.xlane.f32.xlu0 %v2407
    %v2471 = vpop.xlane.xlu0 %2470
    %2472 = vadd.xlane.f32.xlu0 %v2409
    %v2473 = vpop.xlane.xlu0 %2472
    %2474 = vadd.xlane.f32.xlu0 %v2411
    %v2475 = vpop.xlane.xlu0 %2474
    %2476 = vadd.xlane.f32.xlu0 %v2413
    %v2477 = vpop.xlane.xlu0 %2476
    %2478 = vadd.xlane.f32.xlu0 %v2415
    %v2479 = vpop.xlane.xlu0 %2478
    %2480 = vadd.xlane.f32.xlu0 %v2417
    %v2481 = vpop.xlane.xlu0 %2480
    %2482 = vadd.xlane.f32.xlu0 %v2419
    %v2483 = vpop.xlane.xlu0 %2482
    %2484 = vadd.xlane.f32.xlu0 %v2421
    %v2485 = vpop.xlane.xlu0 %2484
    %2486 = vadd.xlane.f32.xlu0 %v2423
    %v2487 = vpop.xlane.xlu0 %2486
    %2488 = vadd.xlane.f32.xlu0 %v2425
    %v2489 = vpop.xlane.xlu0 %2488
    %2490 = vadd.xlane.f32.xlu0 %v2427
    %v2491 = vpop.xlane.xlu0 %2490
    %2492 = vadd.xlane.f32.xlu0 %v2429
    %v2493 = vpop.xlane.xlu0 %2492
    %2494 = vadd.xlane.f32.xlu0 %v2431
    %v2495 = vpop.xlane.xlu0 %2494
    %2496 = vadd.xlane.f32.xlu0 %v2433
    %v2497 = vpop.xlane.xlu0 %2496
    %2498 = vadd.xlane.f32.xlu0 %v2435
    %v2499 = vpop.xlane.xlu0 %2498
    %2500 = vadd.xlane.f32.xlu0 %v2437
    %v2501 = vpop.xlane.xlu0 %2500
    %2502 = vadd.xlane.f32.xlu0 %v2439
    %v2503 = vpop.xlane.xlu0 %2502
    %2504 = vadd.xlane.f32.xlu0 %v2441
    %v2505 = vpop.xlane.xlu0 %2504
    %2506 = vadd.xlane.f32.xlu0 %v2443
    %v2507 = vpop.xlane.xlu0 %2506
    %2508 = vadd.xlane.f32.xlu0 %v2445
    %v2509 = vpop.xlane.xlu0 %2508
    %2510 = vadd.xlane.f32.xlu0 %v2447
    %v2511 = vpop.xlane.xlu0 %2510
    %2512 = vadd.xlane.f32.xlu0 %v2449
    %v2513 = vpop.xlane.xlu0 %2512
    %2514 = vadd.xlane.f32.xlu0 %v2451
    %v2515 = vpop.xlane.xlu0 %2514
    %v2516 = vrcp.pop %v2453
    %v2517 = vmul.f32 %v2389, %v2516
    %v2518 = vrcp.pop %v2455
    %v2519 = vmul.f32 %v2391, %v2518
    %v2520 = vrcp.pop %v2457
    %v2521 = vmul.f32 %v2393, %v2520
    %v2522 = vrcp.pop %v2459
    %v2523 = vmul.f32 %v2395, %v2522
    %v2524 = vrcp.pop %v2461
    %v2525 = vmul.f32 %v2397, %v2524
    %v2526 = vrcp.pop %v2463
    %v2527 = vmul.f32 %v2399, %v2526
    %v2528 = vrcp.pop %v2465
    %v2529 = vmul.f32 %v2401, %v2528
    %v2530 = vrcp.pop %v2467
    %v2531 = vmul.f32 %v2403, %v2530
    %v2532 = vrcp.pop %v2469
    %v2533 = vmul.f32 %v2405, %v2532
    %v2534 = vrcp.pop %v2471
    %v2535 = vmul.f32 %v2407, %v2534
    %v2536 = vrcp.pop %v2473
    %v2537 = vmul.f32 %v2409, %v2536
    %v2538 = vrcp.pop %v2475
    %v2539 = vmul.f32 %v2411, %v2538
    %v2540 = vrcp.pop %v2477
    %v2541 = vmul.f32 %v2413, %v2540
    %v2542 = vrcp.pop %v2479
    %v2543 = vmul.f32 %v2415, %v2542
    %v2544 = vrcp.pop %v2481
    %v2545 = vmul.f32 %v2417, %v2544
    %v2546 = vrcp.pop %v2483
    %v2547 = vmul.f32 %v2419, %v2546
    %v2548 = vrcp.pop %v2485
    %v2549 = vmul.f32 %v2421, %v2548
    %v2550 = vrcp.pop %v2487
    %v2551 = vmul.f32 %v2423, %v2550
    %v2552 = vrcp.pop %v2489
    %v2553 = vmul.f32 %v2425, %v2552
    %v2554 = vrcp.pop %v2491
    %v2555 = vmul.f32 %v2427, %v2554
    %v2556 = vrcp.pop %v2493
    %v2557 = vmul.f32 %v2429, %v2556
    %v2558 = vrcp.pop %v2495
    %v2559 = vmul.f32 %v2431, %v2558
    %v2560 = vrcp.pop %v2497
    %v2561 = vmul.f32 %v2433, %v2560
    %v2562 = vrcp.pop %v2499
    %v2563 = vmul.f32 %v2435, %v2562
    %v2564 = vrcp.pop %v2501
    %v2565 = vmul.f32 %v2437, %v2564
    %v2566 = vrcp.pop %v2503
    %v2567 = vmul.f32 %v2439, %v2566
    %v2568 = vrcp.pop %v2505
    %v2569 = vmul.f32 %v2441, %v2568
    %v2570 = vrcp.pop %v2507
    %v2571 = vmul.f32 %v2443, %v2570
    %v2572 = vrcp.pop %v2509
    %v2573 = vmul.f32 %v2445, %v2572
    %v2574 = vrcp.pop %v2511
    %v2575 = vmul.f32 %v2447, %v2574
    %v2576 = vrcp.pop %v2513
    %v2577 = vmul.f32 %v2449, %v2576
    %v2578 = vrcp.pop %v2515
    %v2579 = vmul.f32 %v2451, %v2578
    %vm2580 = vcmask 64512
    %2581 = vst.msk [vmem:[%s7] sm:$0xff] %vm2580, %v2517
    %2582 = vst.msk [vmem:[%s7 + $0x8] sm:$0xff] %vm2580, %v2519
    %2583 = vst.msk [vmem:[%s7 + $0x10] sm:$0xff] %vm2580, %v2521
    %2584 = vst.msk [vmem:[%s7 + $0x18] sm:$0xff] %vm2580, %v2523
    %2585 = vst.msk [vmem:[%s7 + $0x20] sm:$0xff] %vm2580, %v2525
    %2586 = vst.msk [vmem:[%s7 + $0x28] sm:$0xff] %vm2580, %v2527
    %2587 = vst.msk [vmem:[%s7 + $0x30] sm:$0xff] %vm2580, %v2529
    %2588 = vst.msk [vmem:[%s7 + $0x38] sm:$0xff] %vm2580, %v2531
    %2589 = vst.msk [vmem:[%s7 + $0x40] sm:$0xff] %vm2580, %v2533
    %2590 = vst.msk [vmem:[%s7 + $0x48] sm:$0xff] %vm2580, %v2535
    %2591 = vst.msk [vmem:[%s7 + $0x50] sm:$0xff] %vm2580, %v2537
    %2592 = vst.msk [vmem:[%s7 + $0x58] sm:$0xff] %vm2580, %v2539
    %2593 = vst.msk [vmem:[%s7 + $0x60] sm:$0xff] %vm2580, %v2541
    %2594 = vst.msk [vmem:[%s7 + $0x68] sm:$0xff] %vm2580, %v2543
    %2595 = vst.msk [vmem:[%s7 + $0x70] sm:$0xff] %vm2580, %v2545
    %2596 = vst.msk [vmem:[%s7 + $0x78] sm:$0xff] %vm2580, %v2547
    %2597 = vst.msk [vmem:[%s7 + $0x80] sm:$0xff] %vm2580, %v2549
    %2598 = vst.msk [vmem:[%s7 + $0x88] sm:$0xff] %vm2580, %v2551
    %2599 = vst.msk [vmem:[%s7 + $0x90] sm:$0xff] %vm2580, %v2553
    %2600 = vst.msk [vmem:[%s7 + $0x98] sm:$0xff] %vm2580, %v2555
    %2601 = vst.msk [vmem:[%s7 + $0xa0] sm:$0xff] %vm2580, %v2557
    %2602 = vst.msk [vmem:[%s7 + $0xa8] sm:$0xff] %vm2580, %v2559
    %2603 = vst.msk [vmem:[%s7 + $0xb0] sm:$0xff] %vm2580, %v2561
    %2604 = vst.msk [vmem:[%s7 + $0xb8] sm:$0xff] %vm2580, %v2563
    %2605 = vst.msk [vmem:[%s7 + $0xc0] sm:$0xff] %vm2580, %v2565
    %2606 = vst.msk [vmem:[%s7 + $0xc8] sm:$0xff] %vm2580, %v2567
    %2607 = vst.msk [vmem:[%s7 + $0xd0] sm:$0xff] %vm2580, %v2569
    %2608 = vst.msk [vmem:[%s7 + $0xd8] sm:$0xff] %vm2580, %v2571
    %2609 = vst.msk [vmem:[%s7 + $0xe0] sm:$0xff] %vm2580, %v2573
    %2610 = vst.msk [vmem:[%s7 + $0xe8] sm:$0xff] %vm2580, %v2575
    %2611 = vst.msk [vmem:[%s7 + $0xf0] sm:$0xff] %vm2580, %v2577
    %2612 = vst.msk [vmem:[%s7 + $0xf8] sm:$0xff] %vm2580, %v2579
    // Predicated region
    $region34: #{mlp_forward.1} parent=1 // pred_check
      _
    $region35: #{mlp_forward.1} parent=1 // pred_check_branch
      %2614 = sbr.rel (0) target = $region37
    $region36: #{mlp_forward.1} parent=1 // pred_region
      _
    $region37: #{mlp_forward.1} parent=1 // pred_fallthru
      _
    // Predicated region
    $region38: #{mlp_forward.1} parent=1 // pred_check
      _
    $region39: #{mlp_forward.1} parent=1 // pred_check_branch
      %2616 = sbr.rel (0) target = $region41
    $region40: #{mlp_forward.1} parent=1 // pred_region
      _
    $region41: #{mlp_forward.1} parent=1 // pred_fallthru
      _
    %2617 = vsyncpa [#allocation3], 1

</llo_original>
